<compile_context>
chip_gen: v7x
topology: tpu7x:2x2x1
jax: 0.10.0
libtpu: 0.0.40
codegen_flags: <defaults>
</compile_context>

<pallas_src>
import functools

import jax
import jax.numpy as jnp
from jax.experimental import pallas as pl
from jax.experimental.pallas import tpu as pltpu


def decoder_kernel(z_ref, w1_ref, b1_ref, w2_ref, b2_ref, out_ref):
    # z_ref:  (TB, L)   f32      w1_ref: (L, 512)  bf16    b1_ref: (1, 512) f32
    # w2_ref: (512, 784) bf16    b2_ref: (1, 784)  f32     out_ref: (TB, 784) f32
    wdt = w1_ref.dtype

    # linear1 + relu  (bf16 MXU matmul, f32 accumulation; elementwise in f32)
    h = jnp.dot(z_ref[...].astype(wdt), w1_ref[...],
                preferred_element_type=jnp.float32)
    h = jnp.maximum(h + b1_ref[...], 0.0)

    # linear2 + sigmoid
    o = jnp.dot(h.astype(w2_ref.dtype), w2_ref[...],
                preferred_element_type=jnp.float32)
    o = jax.nn.sigmoid(o + b2_ref[...])

    out_ref[...] = o.astype(out_ref.dtype)


def _round_up(x, m):
    return ((x + m - 1) // m) * m


def prepare_params(w1, b1, w2, b2, *, weight_dtype=jnp.bfloat16):
    """One-time weight prep (do this at init, NOT per call).

    Casts the matmul operands to bf16 for native MXU rate / half the resident
    DMA; biases stay f32 (bias-add, relu, sigmoid run in f32 on the VPU/EUP).
    """
    w1p = w1.astype(weight_dtype)
    w2p = w2.astype(weight_dtype)
    b1p = jnp.asarray(b1, jnp.float32).reshape(1, -1)
    b2p = jnp.asarray(b2, jnp.float32).reshape(1, -1)
    return w1p, b1p, w2p, b2p


@functools.partial(jax.jit, static_argnames=("tb",))
def decoder_forward(z, w1, b1, w2, b2, *, tb=512):
    """z: (B, latent_dims) f32 -> (B, 1, 28, 28) f32.

    Weights/biases should come from `prepare_params` (bf16 weights, f32
    biases); f32 weights also work (kernel casts activations to the weight
    dtype).
    """
    B, L = z.shape
    H = w1.shape[1]          # 512
    OUT = w2.shape[1]        # 784  (== full array dim -> legal lane size)

    # --- batch tiling: TB multiple of 8, pad B up to a multiple of TB -----
    tb_eff = max(8, min(tb, _round_up(B, 8)))
    tb_eff = _round_up(tb_eff, 8)
    # Give both v7x TensorCores work when the batch is big enough.
    if B > 256 and pl.cdiv(B, tb_eff) < 2:
        tb_eff = _round_up(pl.cdiv(B, 2), 8)
    Bp = _round_up(B, tb_eff)
    zp = z if Bp == B else jnp.zeros((Bp, L), z.dtype).at[:B].set(z)

    grid = (Bp // tb_eff,)

    # Advisory cost estimate (weights counted once: they are grid-resident).
    wbytes = w1.dtype.itemsize
    flops = 2 * Bp * (L * H + H * OUT)
    bytes_accessed = (4 * Bp * L                      # z in
                      + wbytes * (L * H + H * OUT)    # weights (resident)
                      + 4 * (H + OUT)                 # biases
                      + 4 * Bp * OUT)                 # output
    cost = pl.CostEstimate(flops=flops,
                           transcendentals=Bp * OUT,
                           bytes_accessed=bytes_accessed)

    out_flat = pl.pallas_call(
        decoder_kernel,
        out_shape=jax.ShapeDtypeStruct((Bp, OUT), jnp.float32),
        grid_spec=pl.GridSpec(
            grid=grid,
            in_specs=[
                pl.BlockSpec((tb_eff, L), lambda i: (i, 0)),  # z: tiled on batch
                pl.BlockSpec((L, H), lambda i: (0, 0)),       # w1: resident
                pl.BlockSpec((1, H), lambda i: (0, 0)),       # b1: resident
                pl.BlockSpec((H, OUT), lambda i: (0, 0)),     # w2: resident
                pl.BlockSpec((1, OUT), lambda i: (0, 0)),     # b2: resident
            ],
            out_specs=pl.BlockSpec((tb_eff, OUT), lambda i: (i, 0)),
        ),
        compiler_params=pltpu.CompilerParams(
            dimension_semantics=("parallel",)),
        cost_estimate=cost,
    )(zp, w1, b1, w2, b2)

    if Bp != B:
        out_flat = out_flat[:B]
    # Final NCHW reshape is pure glue (matches PyTorch .reshape(-1,1,28,28)).
    return out_flat.reshape((-1, 1, 28, 28))


def init_params(key, latent_dims):
    """Deterministic f32 init matching nn.Linear shapes.

    PyTorch nn.Linear stores weight as (out, in) and computes x @ W.T + b.
    We store the transposed weights (in, out) so the kernel does x @ W + b.
    """
    k1, k2, k3, k4 = jax.random.split(key, 4)
    bound1 = 1.0 / jnp.sqrt(latent_dims)
    bound2 = 1.0 / jnp.sqrt(512.0)
    w1 = jax.random.uniform(k1, (latent_dims, 512), jnp.float32, -bound1, bound1)
    b1 = jax.random.uniform(k2, (1, 512), jnp.float32, -bound1, bound1)
    w2 = jax.random.uniform(k3, (512, 784), jnp.float32, -bound2, bound2)
    b2 = jax.random.uniform(k4, (1, 784), jnp.float32, -bound2, bound2)
    return w1, b1, w2, b2


def decoder_ref(z, w1, b1, w2, b2):
    """Pure-JAX f32 reference for correctness checking."""
    h = jax.nn.relu(z @ w1 + b1)
    o = jax.nn.sigmoid(h @ w2 + b2)
    return o.reshape((-1, 1, 28, 28))


if __name__ == "__main__":
    latent_dims = 32
    batch = 8

    key = jax.random.PRNGKey(0)
    k_z, k_p = jax.random.split(key)
    z = jax.random.normal(k_z, (batch, latent_dims), jnp.float32)
    w1, b1, w2, b2 = init_params(k_p, latent_dims)

    # One-time weight prep (bf16 matmul operands, f32 biases).
    w1p, b1p, w2p, b2p = prepare_params(w1, b1, w2, b2)

    out = jax.block_until_ready(decoder_forward(z, w1p, b1p, w2p, b2p))
    ref = decoder_ref(z, w1, b1, w2, b2)
    assert out.shape == (batch, 1, 28, 28), out.shape
    # bf16 MXU operands -> loosened tolerance vs the f32 reference; sigmoid
    # output is in [0,1] so absolute error stays small.
    assert jnp.allclose(out, ref, atol=2e-2, rtol=2e-2), "mismatch vs reference"

    # Batch not a multiple of 8 exercises the batch-padding / crop path.
    z2 = jax.random.normal(jax.random.PRNGKey(1), (13, latent_dims), jnp.float32)
    out2 = jax.block_until_ready(decoder_forward(z2, w1p, b1p, w2p, b2p))
    ref2 = decoder_ref(z2, w1, b1, w2, b2)
    assert out2.shape == (13, 1, 28, 28), out2.shape
    assert jnp.allclose(out2, ref2, atol=2e-2, rtol=2e-2), "mismatch (padded batch)"

    print("KERNEL_OK")
</pallas_src>

<mosaic_0001>
module attributes {stable_mosaic.version = 11 : i64} {
  func.func @decoder_kernel(%arg0: i32, %arg1: memref<8x32xf32, #tpu.memory_space<vmem>>, %arg2: memref<32x512xbf16, #tpu.memory_space<vmem>>, %arg3: memref<1x512xf32, #tpu.memory_space<vmem>>, %arg4: memref<512x784xbf16, #tpu.memory_space<vmem>>, %arg5: memref<1x784xf32, #tpu.memory_space<vmem>>, %arg6: memref<8x784xf32, #tpu.memory_space<vmem>>) attributes {dimension_semantics = [#tpu.dimension_semantics<parallel>], iteration_bounds = array<i64: 1>, scalar_prefetch = 0 : i64, scratch_operands = 0 : i64, tpu.core_type = #tpu.core_type<tc>, window_params = [{transform_indices = @transform_0, window_bounds = array<i64: 8, 32>}, {pipeline_mode = #tpu.pipeline_mode<synchronous>, transform_indices = @transform_1, window_bounds = array<i64: 32, 512>}, {pipeline_mode = #tpu.pipeline_mode<synchronous>, transform_indices = @transform_2, window_bounds = array<i64: 1, 512>}, {pipeline_mode = #tpu.pipeline_mode<synchronous>, transform_indices = @transform_3, window_bounds = array<i64: 512, 784>}, {pipeline_mode = #tpu.pipeline_mode<synchronous>, transform_indices = @transform_4, window_bounds = array<i64: 1, 784>}, {transform_indices = @transform_5, window_bounds = array<i64: 8, 784>}]} {
    %c0 = arith.constant 0 : index
    %c0_0 = arith.constant 0 : index
    %0 = vector.load %arg1[%c0, %c0_0] : memref<8x32xf32, #tpu.memory_space<vmem>>, vector<8x32xf32>
    %1 = arith.truncf %0 : vector<8x32xf32> to vector<8x32xbf16>
    %c0_1 = arith.constant 0 : index
    %c0_2 = arith.constant 0 : index
    %2 = vector.load %arg2[%c0_1, %c0_2] : memref<32x512xbf16, #tpu.memory_space<vmem>>, vector<32x512xbf16>
    %cst = arith.constant dense<0.000000e+00> : vector<8x512xf32>
    %3 = tpu.matmul %1, %2, %cst {dimension_numbers = #tpu.dot_dimension_numbers<[1], [0], [0], [1], [0, 0, 1, 1], [], []>} : vector<8x32xbf16>, vector<32x512xbf16>, vector<8x512xf32> -> vector<8x512xf32>
    %c0_3 = arith.constant 0 : index
    %c0_4 = arith.constant 0 : index
    %4 = vector.load %arg3[%c0_3, %c0_4] : memref<1x512xf32, #tpu.memory_space<vmem>>, vector<1x512xf32>
    %5 = vector.broadcast %4 : vector<1x512xf32> to vector<8x512xf32>
    %6 = arith.addf %3, %5 : vector<8x512xf32>
    %cst_5 = arith.constant 0.000000e+00 : f32
    %7 = vector.broadcast %cst_5 : f32 to vector<8x512xf32>
    %8 = arith.maximumf %6, %7 : vector<8x512xf32>
    %9 = arith.truncf %8 : vector<8x512xf32> to vector<8x512xbf16>
    %c0_6 = arith.constant 0 : index
    %c0_7 = arith.constant 0 : index
    %10 = vector.load %arg4[%c0_6, %c0_7] : memref<512x784xbf16, #tpu.memory_space<vmem>>, vector<512x784xbf16>
    %cst_8 = arith.constant dense<0.000000e+00> : vector<8x784xf32>
    %11 = tpu.matmul %9, %10, %cst_8 {dimension_numbers = #tpu.dot_dimension_numbers<[1], [0], [0], [1], [0, 0, 1, 1], [], []>} : vector<8x512xbf16>, vector<512x784xbf16>, vector<8x784xf32> -> vector<8x784xf32>
    %c0_9 = arith.constant 0 : index
    %c0_10 = arith.constant 0 : index
    %12 = vector.load %arg5[%c0_9, %c0_10] : memref<1x784xf32, #tpu.memory_space<vmem>>, vector<1x784xf32>
    %13 = vector.broadcast %12 : vector<1x784xf32> to vector<8x784xf32>
    %14 = arith.addf %11, %13 : vector<8x784xf32>
    %15 = arith.negf %14 : vector<8x784xf32>
    %16 = math.exp %15 : vector<8x784xf32>
    %cst_11 = arith.constant 1.000000e+00 : f32
    %17 = vector.broadcast %cst_11 : f32 to vector<8x784xf32>
    %18 = arith.addf %17, %16 : vector<8x784xf32>
    %19 = arith.divf %17, %18 : vector<8x784xf32>
    %c0_12 = arith.constant 0 : index
    %c0_13 = arith.constant 0 : index
    %20 = vector.load %arg6[%c0_12, %c0_13] : memref<8x784xf32, #tpu.memory_space<vmem>>, vector<8x784xf32>
    tpu.vector_store %arg6[%c0_12, %c0_13], %19 {strides = array<i32>} : memref<8x784xf32, #tpu.memory_space<vmem>>, vector<8x784xf32>,
    return
  }
  func.func @transform_0(%arg0: i32) -> (i32, i32) {
    %c0_i32 = arith.constant 0 : i32
    %c0_i32_0 = arith.constant 0 : i32
    return %arg0, %c0_i32 : i32, i32
  }
  func.func @transform_1(%arg0: i32) -> (i32, i32) {
    %c0_i32 = arith.constant 0 : i32
    %c0_i32_0 = arith.constant 0 : i32
    %c0_i32_1 = arith.constant 0 : i32
    return %c0_i32, %c0_i32_0 : i32, i32
  }
  func.func @transform_2(%arg0: i32) -> (i32, i32) {
    %c0_i32 = arith.constant 0 : i32
    %c0_i32_0 = arith.constant 0 : i32
    %c0_i32_1 = arith.constant 0 : i32
    return %c0_i32, %c0_i32_0 : i32, i32
  }
  func.func @transform_3(%arg0: i32) -> (i32, i32) {
    %c0_i32 = arith.constant 0 : i32
    %c0_i32_0 = arith.constant 0 : i32
    %c0_i32_1 = arith.constant 0 : i32
    return %c0_i32, %c0_i32_0 : i32, i32
  }
  func.func @transform_4(%arg0: i32) -> (i32, i32) {
    %c0_i32 = arith.constant 0 : i32
    %c0_i32_0 = arith.constant 0 : i32
    %c0_i32_1 = arith.constant 0 : i32
    return %c0_i32, %c0_i32_0 : i32, i32
  }
  func.func @transform_5(%arg0: i32) -> (i32, i32) {
    %c0_i32 = arith.constant 0 : i32
    %c0_i32_0 = arith.constant 0 : i32
    return %arg0, %c0_i32 : i32, i32
  }
}

</mosaic_0001>

<llo_original>
// kernel: decoder_forward.1
$region0: #{decoder_forward.1}
  #allocation0 [shape = 'u32[]', space=smem, size = 0x4, offset = 0x4, fixed_abs, tag = 'smem constant byte address 0x4 - core index']
  #allocation1 [shape = 'u32[144,128]{1,0:T(1,128)}', space=vmem, size = 0x12000, scoped, tag = 'internal scratch']
  %s0 = inlined_call_operand.vmem [shape: f32[8,32], index: 0, kind: input, shape index: {}]
  %s1 = inlined_call_operand.vmem [shape: bf16[32,512], index: 1, kind: input, shape index: {}]
  %s2 = inlined_call_operand.vmem [shape: f32[1,512], index: 2, kind: input, shape index: {}]
  %s3 = inlined_call_operand.vmem [shape: bf16[512,784], index: 3, kind: input, shape index: {}]
  %s4 = inlined_call_operand.vmem [shape: f32[1,784], index: 4, kind: input, shape index: {}]
  %s5 = inlined_call_operand.vmem [shape: f32[8,784], index: 5, kind: output, shape index: {}]
  %s6 = sld [smem:[#allocation0]]
  $region30: #{decoder_forward.1} parent=0
    _
  %s8 = ssub.s32 1, %s6
  %s9 = scalar_select 0, %s8, %s6
  // Predicated region
  $region2: #{decoder_forward.1} parent=0 // pred_check
    _
  $region3: #{decoder_forward.1} parent=0 // pred_check_branch
    %11 = sbr.rel (0) target = $region5
  $region4: #{decoder_forward.1} parent=0 // pred_region
    _
  $region5: #{decoder_forward.1} parent=0 // pred_fallthru
    _
  // Predicated region
  $region6: #{decoder_forward.1} parent=0 // pred_check
    _
  $region7: #{decoder_forward.1} parent=0 // pred_check_branch
    %13 = sbr.rel (0) target = $region9
  $region8: #{decoder_forward.1} parent=0 // pred_region
    _
  $region9: #{decoder_forward.1} parent=0 // pred_fallthru
    _
  // Predicated region
  $region10: #{decoder_forward.1} parent=0 // pred_check
    _
  $region11: #{decoder_forward.1} parent=0 // pred_check_branch
    %15 = sbr.rel (0) target = $region13
  $region12: #{decoder_forward.1} parent=0 // pred_region
    _
  $region13: #{decoder_forward.1} parent=0 // pred_fallthru
    _
  // Predicated region
  $region14: #{decoder_forward.1} parent=0 // pred_check
    _
  $region15: #{decoder_forward.1} parent=0 // pred_check_branch
    %17 = sbr.rel (0) target = $region17
  $region16: #{decoder_forward.1} parent=0 // pred_region
    _
  $region17: #{decoder_forward.1} parent=0 // pred_fallthru
    _
  // Predicated region
  $region18: #{decoder_forward.1} parent=0 // pred_check
    _
  $region19: #{decoder_forward.1} parent=0 // pred_check_branch
    %19 = sbr.rel (0) target = $region21
  $region20: #{decoder_forward.1} parent=0 // pred_region
    _
  $region21: #{decoder_forward.1} parent=0 // pred_fallthru
    _
  %v21 = vld [vmem:[%s0] sm:$0xff]
  %v22 = vpack.c.bf16 %v21, %v21
  %v23 = vld [vmem:[%s1] sm:$0xff]
  %v24 = vld [vmem:[%s1 + $0x8] sm:$0xff]
  %v25 = vld [vmem:[%s1 + $0x10] sm:$0xff]
  %v26 = vld [vmem:[%s1 + $0x18] sm:$0xff]
  %v27 = vld [vmem:[%s1 + $0x20] sm:$0xff]
  %v28 = vld [vmem:[%s1 + $0x28] sm:$0xff]
  %v29 = vld [vmem:[%s1 + $0x30] sm:$0xff]
  %v30 = vld [vmem:[%s1 + $0x38] sm:$0xff]
  %v31 = vld [vmem:[%s2] sm:$0xf]
  %v33 = vlaneseq
  %v34 = vshrl.u32 %v33, 7
  %v35 = vsub.s32 0, %v34
  %v36 = vrot.slane %v31, %v35
  %v37 = vlaneseq
  %v38 = vshrl.u32 %v37, 7
  %v39 = vsub.s32 1, %v38
  %v40 = vrot.slane %v31, %v39
  %v41 = vlaneseq
  %v42 = vshrl.u32 %v41, 7
  %v43 = vsub.s32 2, %v42
  %v44 = vrot.slane %v31, %v43
  %v45 = vlaneseq
  %v46 = vshrl.u32 %v45, 7
  %v47 = vsub.s32 3, %v46
  %v48 = vrot.slane %v31, %v47
  %v61 = vunpack.c.l.b16 %v23
  %v62 = vunpack.c.h.b16 %v23
  %v63 = vunpack.c.l.b16 %v24
  %v64 = vunpack.c.h.b16 %v24
  %v65 = vunpack.c.l.b16 %v25
  %v66 = vunpack.c.h.b16 %v25
  %v67 = vunpack.c.l.b16 %v26
  %v68 = vunpack.c.h.b16 %v26
  %v69 = vunpack.c.l.b16 %v27
  %v70 = vunpack.c.h.b16 %v27
  %v71 = vunpack.c.l.b16 %v28
  %v72 = vunpack.c.h.b16 %v28
  %v73 = vunpack.c.l.b16 %v29
  %v74 = vunpack.c.h.b16 %v29
  %v75 = vunpack.c.l.b16 %v30
  %v76 = vunpack.c.h.b16 %v30
  %v77 = vpack.c.b16 %v65, %v61
  %v78 = vpack.c.b16 %v66, %v62
  %v79 = vpack.c.b16 %v67, %v63
  %v80 = vpack.c.b16 %v68, %v64
  %v81 = vpack.c.b16 %v73, %v69
  %v82 = vpack.c.b16 %v74, %v70
  %v83 = vpack.c.b16 %v75, %v71
  %v84 = vpack.c.b16 %v76, %v72
  %vm93 = vcmask 261120
  %v95 = vsel %vm93, %v22, 0
  %97 = vmatprep.subr.bf16.mxu0 %v78
  %98 = vmatpush1.bf16.msra.mxu0 %v77
  %99 = vmatprep.subr.bf16.mxu0 %v82
  %100 = vmatpush1.bf16.msra.mxu0 %v81
  %101 = vmatprep.subr.bf16.mxu0 0
  %102 = vmatpush1.bf16.msra.mxu0 0
  %103 = vmatprep.subr.bf16.mxu0 0
  %104 = vmatpush1.bf16.msra.mxu0 0
  %105 = vmatprep.subr.bf16.mxu0 0
  %106 = vmatpush1.bf16.msra.mxu0 0
  %107 = vmatprep.subr.bf16.mxu0 0
  %108 = vmatpush1.bf16.msra.mxu0 0
  %109 = vmatprep.subr.bf16.mxu0 0
  %110 = vmatpush1.bf16.msra.mxu0 0
  %111 = vmatprep.subr.bf16.mxu0 0
  %112 = vmatpush1.bf16.msra.mxu0 0
  %113 = vmatprep.subr.bf16.mxu0 0
  %114 = vmatpush1.bf16.msra.mxu0 0
  %115 = vmatprep.subr.bf16.mxu0 0
  %116 = vmatpush1.bf16.msra.mxu0 0
  %117 = vmatprep.subr.bf16.mxu0 0
  %118 = vmatpush1.bf16.msra.mxu0 0
  %119 = vmatprep.subr.bf16.mxu0 0
  %120 = vmatpush1.bf16.msra.mxu0 0
  %121 = vmatprep.subr.bf16.mxu0 0
  %122 = vmatpush1.bf16.msra.mxu0 0
  %123 = vmatprep.subr.bf16.mxu0 0
  %124 = vmatpush1.bf16.msra.mxu0 0
  %125 = vmatprep.subr.bf16.mxu0 0
  %126 = vmatpush1.bf16.msra.mxu0 0
  %127 = vmatprep.subr.bf16.mxu0 0
  %128 = vmatpush1.bf16.msra.mxu0 0
  %129 = vmatprep.mubr.bf16.mxu0 0
  %130 = vmatmul.mubr.bf16.gmra.mrb[0].mxu0 %v95
  %v131 = vpop.f32.mrb[0].mxu0
  %v132 = vadd.f32 %v36, %v131
  %v133 = vpop.f32.mrb[0].mxu0
  %v134 = vadd.f32 %v40, %v133
  %v135 = vpop.f32.mrb[0].mxu0
  %v136 = vpop.f32.mrb[0].mxu0
  %137 = vdwg.mxu0
  %138 = vmatprep.subr.bf16.mxu0 %v80
  %139 = vmatpush1.bf16.msra.mxu0 %v79
  %140 = vmatprep.subr.bf16.mxu0 %v84
  %141 = vmatpush1.bf16.msra.mxu0 %v83
  %142 = vmatprep.subr.bf16.mxu0 0
  %143 = vmatpush1.bf16.msra.mxu0 0
  %144 = vmatprep.subr.bf16.mxu0 0
  %145 = vmatpush1.bf16.msra.mxu0 0
  %146 = vmatprep.subr.bf16.mxu0 0
  %147 = vmatpush1.bf16.msra.mxu0 0
  %148 = vmatprep.subr.bf16.mxu0 0
  %149 = vmatpush1.bf16.msra.mxu0 0
  %150 = vmatprep.subr.bf16.mxu0 0
  %151 = vmatpush1.bf16.msra.mxu0 0
  %152 = vmatprep.subr.bf16.mxu0 0
  %153 = vmatpush1.bf16.msra.mxu0 0
  %154 = vmatprep.subr.bf16.mxu0 0
  %155 = vmatpush1.bf16.msra.mxu0 0
  %156 = vmatprep.subr.bf16.mxu0 0
  %157 = vmatpush1.bf16.msra.mxu0 0
  %158 = vmatprep.subr.bf16.mxu0 0
  %159 = vmatpush1.bf16.msra.mxu0 0
  %160 = vmatprep.subr.bf16.mxu0 0
  %161 = vmatpush1.bf16.msra.mxu0 0
  %162 = vmatprep.subr.bf16.mxu0 0
  %163 = vmatpush1.bf16.msra.mxu0 0
  %164 = vmatprep.subr.bf16.mxu0 0
  %165 = vmatpush1.bf16.msra.mxu0 0
  %166 = vmatprep.subr.bf16.mxu0 0
  %167 = vmatpush1.bf16.msra.mxu0 0
  %168 = vmatprep.subr.bf16.mxu0 0
  %169 = vmatpush1.bf16.msra.mxu0 0
  %170 = vmatprep.mubr.bf16.mxu0 0
  %171 = vmatmul.mubr.bf16.gmra.mrb[0].mxu0 %v95
  %v172 = vpop.f32.mrb[0].mxu0
  %v173 = vadd.f32 %v44, %v172
  %v174 = vpop.f32.mrb[0].mxu0
  %v175 = vadd.f32 %v48, %v174
  %v176 = vpop.f32.mrb[0].mxu0
  %v177 = vpop.f32.mrb[0].mxu0
  %178 = vdwg.mxu0
  %v179 = vmax.f32 %v132, 0.0
  %v180 = vmax.f32 %v134, 0.0
  %v181 = vmax.f32 %v173, 0.0
  %v182 = vmax.f32 %v175, 0.0
  %v183 = vpack.c.bf16 %v179, %v179
  %v184 = vpack.c.bf16 %v180, %v180
  %v185 = vpack.c.bf16 %v181, %v181
  %v186 = vpack.c.bf16 %v182, %v182
  %v187 = vld [vmem:[%s3] sm:$0xff]
  %v188 = vld [vmem:[%s3 + $0x8] sm:$0xff]
  %v189 = vld [vmem:[%s3 + $0x10] sm:$0xff]
  %v190 = vld [vmem:[%s3 + $0x18] sm:$0xf]
  %v191 = vld [vmem:[%s3 + $0x1c] sm:$0xff]
  %v192 = vld [vmem:[%s3 + $0x24] sm:$0xff]
  %v193 = vld [vmem:[%s3 + $0x2c] sm:$0xff]
  %v194 = vld [vmem:[%s3 + $0x34] sm:$0xf]
  %v195 = vld [vmem:[%s3 + $0x38] sm:$0xff]
  %v196 = vld [vmem:[%s3 + $0x40] sm:$0xff]
  %v197 = vld [vmem:[%s3 + $0x48] sm:$0xff]
  %v198 = vld [vmem:[%s3 + $0x50] sm:$0xf]
  %v199 = vld [vmem:[%s3 + $0x54] sm:$0xff]
  %v200 = vld [vmem:[%s3 + $0x5c] sm:$0xff]
  %v201 = vld [vmem:[%s3 + $0x64] sm:$0xff]
  %v202 = vld [vmem:[%s3 + $0x6c] sm:$0xf]
  %v203 = vld [vmem:[%s3 + $0x70] sm:$0xff]
  %v204 = vld [vmem:[%s3 + $0x78] sm:$0xff]
  %v205 = vld [vmem:[%s3 + $0x80] sm:$0xff]
  %v206 = vld [vmem:[%s3 + $0x88] sm:$0xf]
  %v207 = vld [vmem:[%s3 + $0x8c] sm:$0xff]
  %v208 = vld [vmem:[%s3 + $0x94] sm:$0xff]
  %v209 = vld [vmem:[%s3 + $0x9c] sm:$0xff]
  %v210 = vld [vmem:[%s3 + $0xa4] sm:$0xf]
  %v211 = vld [vmem:[%s3 + $0xa8] sm:$0xff]
  %v212 = vld [vmem:[%s3 + $0xb0] sm:$0xff]
  %v213 = vld [vmem:[%s3 + $0xb8] sm:$0xff]
  %v214 = vld [vmem:[%s3 + $0xc0] sm:$0xf]
  %v215 = vld [vmem:[%s3 + $0xc4] sm:$0xff]
  %v216 = vld [vmem:[%s3 + $0xcc] sm:$0xff]
  %v217 = vld [vmem:[%s3 + $0xd4] sm:$0xff]
  %v218 = vld [vmem:[%s3 + $0xdc] sm:$0xf]
  %v219 = vld [vmem:[%s3 + $0xe0] sm:$0xff]
  %v220 = vld [vmem:[%s3 + $0xe8] sm:$0xff]
  %v221 = vld [vmem:[%s3 + $0xf0] sm:$0xff]
  %v222 = vld [vmem:[%s3 + $0xf8] sm:$0xf]
  %v223 = vld [vmem:[%s3 + $0xfc] sm:$0xff]
  %v224 = vld [vmem:[%s3 + $0x104] sm:$0xff]
  %v225 = vld [vmem:[%s3 + $0x10c] sm:$0xff]
  %v226 = vld [vmem:[%s3 + $0x114] sm:$0xf]
  %v227 = vld [vmem:[%s3 + $0x118] sm:$0xff]
  %v228 = vld [vmem:[%s3 + $0x120] sm:$0xff]
  %v229 = vld [vmem:[%s3 + $0x128] sm:$0xff]
  %v230 = vld [vmem:[%s3 + $0x130] sm:$0xf]
  %v231 = vld [vmem:[%s3 + $0x134] sm:$0xff]
  %v232 = vld [vmem:[%s3 + $0x13c] sm:$0xff]
  %v233 = vld [vmem:[%s3 + $0x144] sm:$0xff]
  %v234 = vld [vmem:[%s3 + $0x14c] sm:$0xf]
  %v235 = vld [vmem:[%s3 + $0x150] sm:$0xff]
  %v236 = vld [vmem:[%s3 + $0x158] sm:$0xff]
  %v237 = vld [vmem:[%s3 + $0x160] sm:$0xff]
  %v238 = vld [vmem:[%s3 + $0x168] sm:$0xf]
  %v239 = vld [vmem:[%s3 + $0x16c] sm:$0xff]
  %v240 = vld [vmem:[%s3 + $0x174] sm:$0xff]
  %v241 = vld [vmem:[%s3 + $0x17c] sm:$0xff]
  %v242 = vld [vmem:[%s3 + $0x184] sm:$0xf]
  %v243 = vld [vmem:[%s3 + $0x188] sm:$0xff]
  %v244 = vld [vmem:[%s3 + $0x190] sm:$0xff]
  %v245 = vld [vmem:[%s3 + $0x198] sm:$0xff]
  %v246 = vld [vmem:[%s3 + $0x1a0] sm:$0xf]
  %v247 = vld [vmem:[%s3 + $0x1a4] sm:$0xff]
  %v248 = vld [vmem:[%s3 + $0x1ac] sm:$0xff]
  %v249 = vld [vmem:[%s3 + $0x1b4] sm:$0xff]
  %v250 = vld [vmem:[%s3 + $0x1bc] sm:$0xf]
  %v251 = vld [vmem:[%s3 + $0x1c0] sm:$0xff]
  %v252 = vld [vmem:[%s3 + $0x1c8] sm:$0xff]
  %v253 = vld [vmem:[%s3 + $0x1d0] sm:$0xff]
  %v254 = vld [vmem:[%s3 + $0x1d8] sm:$0xf]
  %v255 = vld [vmem:[%s3 + $0x1dc] sm:$0xff]
  %v256 = vld [vmem:[%s3 + $0x1e4] sm:$0xff]
  %v257 = vld [vmem:[%s3 + $0x1ec] sm:$0xff]
  %v258 = vld [vmem:[%s3 + $0x1f4] sm:$0xf]
  %v259 = vld [vmem:[%s3 + $0x1f8] sm:$0xff]
  %v260 = vld [vmem:[%s3 + $0x200] sm:$0xff]
  %v261 = vld [vmem:[%s3 + $0x208] sm:$0xff]
  %v262 = vld [vmem:[%s3 + $0x210] sm:$0xf]
  %v263 = vld [vmem:[%s3 + $0x214] sm:$0xff]
  %v264 = vld [vmem:[%s3 + $0x21c] sm:$0xff]
  %v265 = vld [vmem:[%s3 + $0x224] sm:$0xff]
  %v266 = vld [vmem:[%s3 + $0x22c] sm:$0xf]
  %v267 = vld [vmem:[%s3 + $0x230] sm:$0xff]
  %v268 = vld [vmem:[%s3 + $0x238] sm:$0xff]
  %v269 = vld [vmem:[%s3 + $0x240] sm:$0xff]
  %v270 = vld [vmem:[%s3 + $0x248] sm:$0xf]
  %v271 = vld [vmem:[%s3 + $0x24c] sm:$0xff]
  %v272 = vld [vmem:[%s3 + $0x254] sm:$0xff]
  %v273 = vld [vmem:[%s3 + $0x25c] sm:$0xff]
  %v274 = vld [vmem:[%s3 + $0x264] sm:$0xf]
  %v275 = vld [vmem:[%s3 + $0x268] sm:$0xff]
  %v276 = vld [vmem:[%s3 + $0x270] sm:$0xff]
  %v277 = vld [vmem:[%s3 + $0x278] sm:$0xff]
  %v278 = vld [vmem:[%s3 + $0x280] sm:$0xf]
  %v279 = vld [vmem:[%s3 + $0x284] sm:$0xff]
  %v280 = vld [vmem:[%s3 + $0x28c] sm:$0xff]
  %v281 = vld [vmem:[%s3 + $0x294] sm:$0xff]
  %v282 = vld [vmem:[%s3 + $0x29c] sm:$0xf]
  %v283 = vld [vmem:[%s3 + $0x2a0] sm:$0xff]
  %v284 = vld [vmem:[%s3 + $0x2a8] sm:$0xff]
  %v285 = vld [vmem:[%s3 + $0x2b0] sm:$0xff]
  %v286 = vld [vmem:[%s3 + $0x2b8] sm:$0xf]
  %v287 = vld [vmem:[%s3 + $0x2bc] sm:$0xff]
  %v288 = vld [vmem:[%s3 + $0x2c4] sm:$0xff]
  %v289 = vld [vmem:[%s3 + $0x2cc] sm:$0xff]
  %v290 = vld [vmem:[%s3 + $0x2d4] sm:$0xf]
  %v291 = vld [vmem:[%s3 + $0x2d8] sm:$0xff]
  %v292 = vld [vmem:[%s3 + $0x2e0] sm:$0xff]
  %v293 = vld [vmem:[%s3 + $0x2e8] sm:$0xff]
  %v294 = vld [vmem:[%s3 + $0x2f0] sm:$0xf]
  %v295 = vld [vmem:[%s3 + $0x2f4] sm:$0xff]
  %v296 = vld [vmem:[%s3 + $0x2fc] sm:$0xff]
  %v297 = vld [vmem:[%s3 + $0x304] sm:$0xff]
  %v298 = vld [vmem:[%s3 + $0x30c] sm:$0xf]
  %v299 = vld [vmem:[%s3 + $0x310] sm:$0xff]
  %v300 = vld [vmem:[%s3 + $0x318] sm:$0xff]
  %v301 = vld [vmem:[%s3 + $0x320] sm:$0xff]
  %v302 = vld [vmem:[%s3 + $0x328] sm:$0xf]
  %v303 = vld [vmem:[%s3 + $0x32c] sm:$0xff]
  %v304 = vld [vmem:[%s3 + $0x334] sm:$0xff]
  %v305 = vld [vmem:[%s3 + $0x33c] sm:$0xff]
  %v306 = vld [vmem:[%s3 + $0x344] sm:$0xf]
  %v307 = vld [vmem:[%s3 + $0x348] sm:$0xff]
  %v308 = vld [vmem:[%s3 + $0x350] sm:$0xff]
  %v309 = vld [vmem:[%s3 + $0x358] sm:$0xff]
  %v310 = vld [vmem:[%s3 + $0x360] sm:$0xf]
  %v311 = vld [vmem:[%s3 + $0x364] sm:$0xff]
  %v312 = vld [vmem:[%s3 + $0x36c] sm:$0xff]
  %v313 = vld [vmem:[%s3 + $0x374] sm:$0xff]
  %v314 = vld [vmem:[%s3 + $0x37c] sm:$0xf]
  %v315 = vld [vmem:[%s3 + $0x380] sm:$0xff]
  %v316 = vld [vmem:[%s3 + $0x388] sm:$0xff]
  %v317 = vld [vmem:[%s3 + $0x390] sm:$0xff]
  %v318 = vld [vmem:[%s3 + $0x398] sm:$0xf]
  %v319 = vld [vmem:[%s3 + $0x39c] sm:$0xff]
  %v320 = vld [vmem:[%s3 + $0x3a4] sm:$0xff]
  %v321 = vld [vmem:[%s3 + $0x3ac] sm:$0xff]
  %v322 = vld [vmem:[%s3 + $0x3b4] sm:$0xf]
  %v323 = vld [vmem:[%s3 + $0x3b8] sm:$0xff]
  %v324 = vld [vmem:[%s3 + $0x3c0] sm:$0xff]
  %v325 = vld [vmem:[%s3 + $0x3c8] sm:$0xff]
  %v326 = vld [vmem:[%s3 + $0x3d0] sm:$0xf]
  %v327 = vld [vmem:[%s3 + $0x3d4] sm:$0xff]
  %v328 = vld [vmem:[%s3 + $0x3dc] sm:$0xff]
  %v329 = vld [vmem:[%s3 + $0x3e4] sm:$0xff]
  %v330 = vld [vmem:[%s3 + $0x3ec] sm:$0xf]
  %v331 = vld [vmem:[%s3 + $0x3f0] sm:$0xff]
  %v332 = vld [vmem:[%s3 + $0x3f8] sm:$0xff]
  %v333 = vld [vmem:[%s3 + $0x400] sm:$0xff]
  %v334 = vld [vmem:[%s3 + $0x408] sm:$0xf]
  %v335 = vld [vmem:[%s3 + $0x40c] sm:$0xff]
  %v336 = vld [vmem:[%s3 + $0x414] sm:$0xff]
  %v337 = vld [vmem:[%s3 + $0x41c] sm:$0xff]
  %v338 = vld [vmem:[%s3 + $0x424] sm:$0xf]
  %v339 = vld [vmem:[%s3 + $0x428] sm:$0xff]
  %v340 = vld [vmem:[%s3 + $0x430] sm:$0xff]
  %v341 = vld [vmem:[%s3 + $0x438] sm:$0xff]
  %v342 = vld [vmem:[%s3 + $0x440] sm:$0xf]
  %v343 = vld [vmem:[%s3 + $0x444] sm:$0xff]
  %v344 = vld [vmem:[%s3 + $0x44c] sm:$0xff]
  %v345 = vld [vmem:[%s3 + $0x454] sm:$0xff]
  %v346 = vld [vmem:[%s3 + $0x45c] sm:$0xf]
  %v347 = vld [vmem:[%s3 + $0x460] sm:$0xff]
  %v348 = vld [vmem:[%s3 + $0x468] sm:$0xff]
  %v349 = vld [vmem:[%s3 + $0x470] sm:$0xff]
  %v350 = vld [vmem:[%s3 + $0x478] sm:$0xf]
  %v351 = vld [vmem:[%s3 + $0x47c] sm:$0xff]
  %v352 = vld [vmem:[%s3 + $0x484] sm:$0xff]
  %v353 = vld [vmem:[%s3 + $0x48c] sm:$0xff]
  %v354 = vld [vmem:[%s3 + $0x494] sm:$0xf]
  %v355 = vld [vmem:[%s3 + $0x498] sm:$0xff]
  %v356 = vld [vmem:[%s3 + $0x4a0] sm:$0xff]
  %v357 = vld [vmem:[%s3 + $0x4a8] sm:$0xff]
  %v358 = vld [vmem:[%s3 + $0x4b0] sm:$0xf]
  %v359 = vld [vmem:[%s3 + $0x4b4] sm:$0xff]
  %v360 = vld [vmem:[%s3 + $0x4bc] sm:$0xff]
  %v361 = vld [vmem:[%s3 + $0x4c4] sm:$0xff]
  %v362 = vld [vmem:[%s3 + $0x4cc] sm:$0xf]
  %v363 = vld [vmem:[%s3 + $0x4d0] sm:$0xff]
  %v364 = vld [vmem:[%s3 + $0x4d8] sm:$0xff]
  %v365 = vld [vmem:[%s3 + $0x4e0] sm:$0xff]
  %v366 = vld [vmem:[%s3 + $0x4e8] sm:$0xf]
  %v367 = vld [vmem:[%s3 + $0x4ec] sm:$0xff]
  %v368 = vld [vmem:[%s3 + $0x4f4] sm:$0xff]
  %v369 = vld [vmem:[%s3 + $0x4fc] sm:$0xff]
  %v370 = vld [vmem:[%s3 + $0x504] sm:$0xf]
  %v371 = vld [vmem:[%s3 + $0x508] sm:$0xff]
  %v372 = vld [vmem:[%s3 + $0x510] sm:$0xff]
  %v373 = vld [vmem:[%s3 + $0x518] sm:$0xff]
  %v374 = vld [vmem:[%s3 + $0x520] sm:$0xf]
  %v375 = vld [vmem:[%s3 + $0x524] sm:$0xff]
  %v376 = vld [vmem:[%s3 + $0x52c] sm:$0xff]
  %v377 = vld [vmem:[%s3 + $0x534] sm:$0xff]
  %v378 = vld [vmem:[%s3 + $0x53c] sm:$0xf]
  %v379 = vld [vmem:[%s3 + $0x540] sm:$0xff]
  %v380 = vld [vmem:[%s3 + $0x548] sm:$0xff]
  %v381 = vld [vmem:[%s3 + $0x550] sm:$0xff]
  %v382 = vld [vmem:[%s3 + $0x558] sm:$0xf]
  %v383 = vld [vmem:[%s3 + $0x55c] sm:$0xff]
  %v384 = vld [vmem:[%s3 + $0x564] sm:$0xff]
  %v385 = vld [vmem:[%s3 + $0x56c] sm:$0xff]
  %v386 = vld [vmem:[%s3 + $0x574] sm:$0xf]
  %v387 = vld [vmem:[%s3 + $0x578] sm:$0xff]
  %v388 = vld [vmem:[%s3 + $0x580] sm:$0xff]
  %v389 = vld [vmem:[%s3 + $0x588] sm:$0xff]
  %v390 = vld [vmem:[%s3 + $0x590] sm:$0xf]
  %v391 = vld [vmem:[%s3 + $0x594] sm:$0xff]
  %v392 = vld [vmem:[%s3 + $0x59c] sm:$0xff]
  %v393 = vld [vmem:[%s3 + $0x5a4] sm:$0xff]
  %v394 = vld [vmem:[%s3 + $0x5ac] sm:$0xf]
  %v395 = vld [vmem:[%s3 + $0x5b0] sm:$0xff]
  %v396 = vld [vmem:[%s3 + $0x5b8] sm:$0xff]
  %v397 = vld [vmem:[%s3 + $0x5c0] sm:$0xff]
  %v398 = vld [vmem:[%s3 + $0x5c8] sm:$0xf]
  %v399 = vld [vmem:[%s3 + $0x5cc] sm:$0xff]
  %v400 = vld [vmem:[%s3 + $0x5d4] sm:$0xff]
  %v401 = vld [vmem:[%s3 + $0x5dc] sm:$0xff]
  %v402 = vld [vmem:[%s3 + $0x5e4] sm:$0xf]
  %v403 = vld [vmem:[%s3 + $0x5e8] sm:$0xff]
  %v404 = vld [vmem:[%s3 + $0x5f0] sm:$0xff]
  %v405 = vld [vmem:[%s3 + $0x5f8] sm:$0xff]
  %v406 = vld [vmem:[%s3 + $0x600] sm:$0xf]
  %v407 = vld [vmem:[%s3 + $0x604] sm:$0xff]
  %v408 = vld [vmem:[%s3 + $0x60c] sm:$0xff]
  %v409 = vld [vmem:[%s3 + $0x614] sm:$0xff]
  %v410 = vld [vmem:[%s3 + $0x61c] sm:$0xf]
  %v411 = vld [vmem:[%s3 + $0x620] sm:$0xff]
  %v412 = vld [vmem:[%s3 + $0x628] sm:$0xff]
  %v413 = vld [vmem:[%s3 + $0x630] sm:$0xff]
  %v414 = vld [vmem:[%s3 + $0x638] sm:$0xf]
  %v415 = vld [vmem:[%s3 + $0x63c] sm:$0xff]
  %v416 = vld [vmem:[%s3 + $0x644] sm:$0xff]
  %v417 = vld [vmem:[%s3 + $0x64c] sm:$0xff]
  %v418 = vld [vmem:[%s3 + $0x654] sm:$0xf]
  %v419 = vld [vmem:[%s3 + $0x658] sm:$0xff]
  %v420 = vld [vmem:[%s3 + $0x660] sm:$0xff]
  %v421 = vld [vmem:[%s3 + $0x668] sm:$0xff]
  %v422 = vld [vmem:[%s3 + $0x670] sm:$0xf]
  %v423 = vld [vmem:[%s3 + $0x674] sm:$0xff]
  %v424 = vld [vmem:[%s3 + $0x67c] sm:$0xff]
  %v425 = vld [vmem:[%s3 + $0x684] sm:$0xff]
  %v426 = vld [vmem:[%s3 + $0x68c] sm:$0xf]
  %v427 = vld [vmem:[%s3 + $0x690] sm:$0xff]
  %v428 = vld [vmem:[%s3 + $0x698] sm:$0xff]
  %v429 = vld [vmem:[%s3 + $0x6a0] sm:$0xff]
  %v430 = vld [vmem:[%s3 + $0x6a8] sm:$0xf]
  %v431 = vld [vmem:[%s3 + $0x6ac] sm:$0xff]
  %v432 = vld [vmem:[%s3 + $0x6b4] sm:$0xff]
  %v433 = vld [vmem:[%s3 + $0x6bc] sm:$0xff]
  %v434 = vld [vmem:[%s3 + $0x6c4] sm:$0xf]
  %v435 = vld [vmem:[%s3 + $0x6c8] sm:$0xff]
  %v436 = vld [vmem:[%s3 + $0x6d0] sm:$0xff]
  %v437 = vld [vmem:[%s3 + $0x6d8] sm:$0xff]
  %v438 = vld [vmem:[%s3 + $0x6e0] sm:$0xf]
  %v439 = vld [vmem:[%s3 + $0x6e4] sm:$0xff]
  %v440 = vld [vmem:[%s3 + $0x6ec] sm:$0xff]
  %v441 = vld [vmem:[%s3 + $0x6f4] sm:$0xff]
  %v442 = vld [vmem:[%s3 + $0x6fc] sm:$0xf]
  %v443 = vld [vmem:[%s4] sm:$0x7f]
  %v445 = vlaneseq
  %v446 = vshrl.u32 %v445, 7
  %v447 = vsub.s32 0, %v446
  %v448 = vrot.slane %v443, %v447
  %v449 = vlaneseq
  %v450 = vshrl.u32 %v449, 7
  %v451 = vsub.s32 1, %v450
  %v452 = vrot.slane %v443, %v451
  %v453 = vlaneseq
  %v454 = vshrl.u32 %v453, 7
  %v455 = vsub.s32 2, %v454
  %v456 = vrot.slane %v443, %v455
  %v457 = vlaneseq
  %v458 = vshrl.u32 %v457, 7
  %v459 = vsub.s32 3, %v458
  %v460 = vrot.slane %v443, %v459
  %v461 = vlaneseq
  %v462 = vshrl.u32 %v461, 7
  %v463 = vsub.s32 4, %v462
  %v464 = vrot.slane %v443, %v463
  %v465 = vlaneseq
  %v466 = vshrl.u32 %v465, 7
  %v467 = vsub.s32 5, %v466
  %v468 = vrot.slane %v443, %v467
  %v469 = vlaneseq
  %v470 = vshrl.u32 %v469, 7
  %v471 = vsub.s32 6, %v470
  %v472 = vrot.slane %v443, %v471
  %v736 = vunpack.c.l.b16 %v187
  %v737 = vunpack.c.h.b16 %v187
  %v738 = vunpack.c.l.b16 %v188
  %v739 = vunpack.c.h.b16 %v188
  %v740 = vunpack.c.l.b16 %v189
  %v741 = vunpack.c.h.b16 %v189
  %v742 = vunpack.c.l.b16 %v190
  %v743 = vunpack.c.l.b16 %v191
  %v744 = vunpack.c.h.b16 %v191
  %v745 = vunpack.c.l.b16 %v192
  %v746 = vunpack.c.h.b16 %v192
  %v747 = vunpack.c.l.b16 %v193
  %v748 = vunpack.c.h.b16 %v193
  %v749 = vunpack.c.l.b16 %v194
  %v750 = vunpack.c.l.b16 %v195
  %v751 = vunpack.c.h.b16 %v195
  %v752 = vunpack.c.l.b16 %v196
  %v753 = vunpack.c.h.b16 %v196
  %v754 = vunpack.c.l.b16 %v197
  %v755 = vunpack.c.h.b16 %v197
  %v756 = vunpack.c.l.b16 %v198
  %v757 = vunpack.c.l.b16 %v199
  %v758 = vunpack.c.h.b16 %v199
  %v759 = vunpack.c.l.b16 %v200
  %v760 = vunpack.c.h.b16 %v200
  %v761 = vunpack.c.l.b16 %v201
  %v762 = vunpack.c.h.b16 %v201
  %v763 = vunpack.c.l.b16 %v202
  %v764 = vunpack.c.l.b16 %v203
  %v765 = vunpack.c.h.b16 %v203
  %v766 = vunpack.c.l.b16 %v204
  %v767 = vunpack.c.h.b16 %v204
  %v768 = vunpack.c.l.b16 %v205
  %v769 = vunpack.c.h.b16 %v205
  %v770 = vunpack.c.l.b16 %v206
  %v771 = vunpack.c.l.b16 %v207
  %v772 = vunpack.c.h.b16 %v207
  %v773 = vunpack.c.l.b16 %v208
  %v774 = vunpack.c.h.b16 %v208
  %v775 = vunpack.c.l.b16 %v209
  %v776 = vunpack.c.h.b16 %v209
  %v777 = vunpack.c.l.b16 %v210
  %v778 = vunpack.c.l.b16 %v211
  %v779 = vunpack.c.h.b16 %v211
  %v780 = vunpack.c.l.b16 %v212
  %v781 = vunpack.c.h.b16 %v212
  %v782 = vunpack.c.l.b16 %v213
  %v783 = vunpack.c.h.b16 %v213
  %v784 = vunpack.c.l.b16 %v214
  %v785 = vunpack.c.l.b16 %v215
  %v786 = vunpack.c.h.b16 %v215
  %v787 = vunpack.c.l.b16 %v216
  %v788 = vunpack.c.h.b16 %v216
  %v789 = vunpack.c.l.b16 %v217
  %v790 = vunpack.c.h.b16 %v217
  %v791 = vunpack.c.l.b16 %v218
  %v792 = vunpack.c.l.b16 %v219
  %v793 = vunpack.c.h.b16 %v219
  %v794 = vunpack.c.l.b16 %v220
  %v795 = vunpack.c.h.b16 %v220
  %v796 = vunpack.c.l.b16 %v221
  %v797 = vunpack.c.h.b16 %v221
  %v798 = vunpack.c.l.b16 %v222
  %v799 = vunpack.c.l.b16 %v223
  %v800 = vunpack.c.h.b16 %v223
  %v801 = vunpack.c.l.b16 %v224
  %v802 = vunpack.c.h.b16 %v224
  %v803 = vunpack.c.l.b16 %v225
  %v804 = vunpack.c.h.b16 %v225
  %v805 = vunpack.c.l.b16 %v226
  %v806 = vunpack.c.l.b16 %v227
  %v807 = vunpack.c.h.b16 %v227
  %v808 = vunpack.c.l.b16 %v228
  %v809 = vunpack.c.h.b16 %v228
  %v810 = vunpack.c.l.b16 %v229
  %v811 = vunpack.c.h.b16 %v229
  %v812 = vunpack.c.l.b16 %v230
  %v813 = vunpack.c.l.b16 %v231
  %v814 = vunpack.c.h.b16 %v231
  %v815 = vunpack.c.l.b16 %v232
  %v816 = vunpack.c.h.b16 %v232
  %v817 = vunpack.c.l.b16 %v233
  %v818 = vunpack.c.h.b16 %v233
  %v819 = vunpack.c.l.b16 %v234
  %v820 = vunpack.c.l.b16 %v235
  %v821 = vunpack.c.h.b16 %v235
  %v822 = vunpack.c.l.b16 %v236
  %v823 = vunpack.c.h.b16 %v236
  %v824 = vunpack.c.l.b16 %v237
  %v825 = vunpack.c.h.b16 %v237
  %v826 = vunpack.c.l.b16 %v238
  %v827 = vunpack.c.l.b16 %v239
  %v828 = vunpack.c.h.b16 %v239
  %v829 = vunpack.c.l.b16 %v240
  %v830 = vunpack.c.h.b16 %v240
  %v831 = vunpack.c.l.b16 %v241
  %v832 = vunpack.c.h.b16 %v241
  %v833 = vunpack.c.l.b16 %v242
  %v834 = vunpack.c.l.b16 %v243
  %v835 = vunpack.c.h.b16 %v243
  %v836 = vunpack.c.l.b16 %v244
  %v837 = vunpack.c.h.b16 %v244
  %v838 = vunpack.c.l.b16 %v245
  %v839 = vunpack.c.h.b16 %v245
  %v840 = vunpack.c.l.b16 %v246
  %v841 = vunpack.c.l.b16 %v247
  %v842 = vunpack.c.h.b16 %v247
  %v843 = vunpack.c.l.b16 %v248
  %v844 = vunpack.c.h.b16 %v248
  %v845 = vunpack.c.l.b16 %v249
  %v846 = vunpack.c.h.b16 %v249
  %v847 = vunpack.c.l.b16 %v250
  %v848 = vunpack.c.l.b16 %v251
  %v849 = vunpack.c.h.b16 %v251
  %v850 = vunpack.c.l.b16 %v252
  %v851 = vunpack.c.h.b16 %v252
  %v852 = vunpack.c.l.b16 %v253
  %v853 = vunpack.c.h.b16 %v253
  %v854 = vunpack.c.l.b16 %v254
  %v855 = vunpack.c.l.b16 %v255
  %v856 = vunpack.c.h.b16 %v255
  %v857 = vunpack.c.l.b16 %v256
  %v858 = vunpack.c.h.b16 %v256
  %v859 = vunpack.c.l.b16 %v257
  %v860 = vunpack.c.h.b16 %v257
  %v861 = vunpack.c.l.b16 %v258
  %v862 = vunpack.c.l.b16 %v259
  %v863 = vunpack.c.h.b16 %v259
  %v864 = vunpack.c.l.b16 %v260
  %v865 = vunpack.c.h.b16 %v260
  %v866 = vunpack.c.l.b16 %v261
  %v867 = vunpack.c.h.b16 %v261
  %v868 = vunpack.c.l.b16 %v262
  %v869 = vunpack.c.l.b16 %v263
  %v870 = vunpack.c.h.b16 %v263
  %v871 = vunpack.c.l.b16 %v264
  %v872 = vunpack.c.h.b16 %v264
  %v873 = vunpack.c.l.b16 %v265
  %v874 = vunpack.c.h.b16 %v265
  %v875 = vunpack.c.l.b16 %v266
  %v876 = vunpack.c.l.b16 %v267
  %v877 = vunpack.c.h.b16 %v267
  %v878 = vunpack.c.l.b16 %v268
  %v879 = vunpack.c.h.b16 %v268
  %v880 = vunpack.c.l.b16 %v269
  %v881 = vunpack.c.h.b16 %v269
  %v882 = vunpack.c.l.b16 %v270
  %v883 = vunpack.c.l.b16 %v271
  %v884 = vunpack.c.h.b16 %v271
  %v885 = vunpack.c.l.b16 %v272
  %v886 = vunpack.c.h.b16 %v272
  %v887 = vunpack.c.l.b16 %v273
  %v888 = vunpack.c.h.b16 %v273
  %v889 = vunpack.c.l.b16 %v274
  %v890 = vunpack.c.l.b16 %v275
  %v891 = vunpack.c.h.b16 %v275
  %v892 = vunpack.c.l.b16 %v276
  %v893 = vunpack.c.h.b16 %v276
  %v894 = vunpack.c.l.b16 %v277
  %v895 = vunpack.c.h.b16 %v277
  %v896 = vunpack.c.l.b16 %v278
  %v897 = vunpack.c.l.b16 %v279
  %v898 = vunpack.c.h.b16 %v279
  %v899 = vunpack.c.l.b16 %v280
  %v900 = vunpack.c.h.b16 %v280
  %v901 = vunpack.c.l.b16 %v281
  %v902 = vunpack.c.h.b16 %v281
  %v903 = vunpack.c.l.b16 %v282
  %v904 = vunpack.c.l.b16 %v283
  %v905 = vunpack.c.h.b16 %v283
  %v906 = vunpack.c.l.b16 %v284
  %v907 = vunpack.c.h.b16 %v284
  %v908 = vunpack.c.l.b16 %v285
  %v909 = vunpack.c.h.b16 %v285
  %v910 = vunpack.c.l.b16 %v286
  %v911 = vunpack.c.l.b16 %v287
  %v912 = vunpack.c.h.b16 %v287
  %v913 = vunpack.c.l.b16 %v288
  %v914 = vunpack.c.h.b16 %v288
  %v915 = vunpack.c.l.b16 %v289
  %v916 = vunpack.c.h.b16 %v289
  %v917 = vunpack.c.l.b16 %v290
  %v918 = vunpack.c.l.b16 %v291
  %v919 = vunpack.c.h.b16 %v291
  %v920 = vunpack.c.l.b16 %v292
  %v921 = vunpack.c.h.b16 %v292
  %v922 = vunpack.c.l.b16 %v293
  %v923 = vunpack.c.h.b16 %v293
  %v924 = vunpack.c.l.b16 %v294
  %v925 = vunpack.c.l.b16 %v295
  %v926 = vunpack.c.h.b16 %v295
  %v927 = vunpack.c.l.b16 %v296
  %v928 = vunpack.c.h.b16 %v296
  %v929 = vunpack.c.l.b16 %v297
  %v930 = vunpack.c.h.b16 %v297
  %v931 = vunpack.c.l.b16 %v298
  %v932 = vunpack.c.l.b16 %v299
  %v933 = vunpack.c.h.b16 %v299
  %v934 = vunpack.c.l.b16 %v300
  %v935 = vunpack.c.h.b16 %v300
  %v936 = vunpack.c.l.b16 %v301
  %v937 = vunpack.c.h.b16 %v301
  %v938 = vunpack.c.l.b16 %v302
  %v939 = vunpack.c.l.b16 %v303
  %v940 = vunpack.c.h.b16 %v303
  %v941 = vunpack.c.l.b16 %v304
  %v942 = vunpack.c.h.b16 %v304
  %v943 = vunpack.c.l.b16 %v305
  %v944 = vunpack.c.h.b16 %v305
  %v945 = vunpack.c.l.b16 %v306
  %v946 = vunpack.c.l.b16 %v307
  %v947 = vunpack.c.h.b16 %v307
  %v948 = vunpack.c.l.b16 %v308
  %v949 = vunpack.c.h.b16 %v308
  %v950 = vunpack.c.l.b16 %v309
  %v951 = vunpack.c.h.b16 %v309
  %v952 = vunpack.c.l.b16 %v310
  %v953 = vunpack.c.l.b16 %v311
  %v954 = vunpack.c.h.b16 %v311
  %v955 = vunpack.c.l.b16 %v312
  %v956 = vunpack.c.h.b16 %v312
  %v957 = vunpack.c.l.b16 %v313
  %v958 = vunpack.c.h.b16 %v313
  %v959 = vunpack.c.l.b16 %v314
  %v960 = vunpack.c.l.b16 %v315
  %v961 = vunpack.c.h.b16 %v315
  %v962 = vunpack.c.l.b16 %v316
  %v963 = vunpack.c.h.b16 %v316
  %v964 = vunpack.c.l.b16 %v317
  %v965 = vunpack.c.h.b16 %v317
  %v966 = vunpack.c.l.b16 %v318
  %v967 = vunpack.c.l.b16 %v319
  %v968 = vunpack.c.h.b16 %v319
  %v969 = vunpack.c.l.b16 %v320
  %v970 = vunpack.c.h.b16 %v320
  %v971 = vunpack.c.l.b16 %v321
  %v972 = vunpack.c.h.b16 %v321
  %v973 = vunpack.c.l.b16 %v322
  %v974 = vunpack.c.l.b16 %v323
  %v975 = vunpack.c.h.b16 %v323
  %v976 = vunpack.c.l.b16 %v324
  %v977 = vunpack.c.h.b16 %v324
  %v978 = vunpack.c.l.b16 %v325
  %v979 = vunpack.c.h.b16 %v325
  %v980 = vunpack.c.l.b16 %v326
  %v981 = vunpack.c.l.b16 %v327
  %v982 = vunpack.c.h.b16 %v327
  %v983 = vunpack.c.l.b16 %v328
  %v984 = vunpack.c.h.b16 %v328
  %v985 = vunpack.c.l.b16 %v329
  %v986 = vunpack.c.h.b16 %v329
  %v987 = vunpack.c.l.b16 %v330
  %v988 = vunpack.c.l.b16 %v331
  %v989 = vunpack.c.h.b16 %v331
  %v990 = vunpack.c.l.b16 %v332
  %v991 = vunpack.c.h.b16 %v332
  %v992 = vunpack.c.l.b16 %v333
  %v993 = vunpack.c.h.b16 %v333
  %v994 = vunpack.c.l.b16 %v334
  %v995 = vunpack.c.l.b16 %v335
  %v996 = vunpack.c.h.b16 %v335
  %v997 = vunpack.c.l.b16 %v336
  %v998 = vunpack.c.h.b16 %v336
  %v999 = vunpack.c.l.b16 %v337
  %v1000 = vunpack.c.h.b16 %v337
  %v1001 = vunpack.c.l.b16 %v338
  %v1002 = vunpack.c.l.b16 %v339
  %v1003 = vunpack.c.h.b16 %v339
  %v1004 = vunpack.c.l.b16 %v340
  %v1005 = vunpack.c.h.b16 %v340
  %v1006 = vunpack.c.l.b16 %v341
  %v1007 = vunpack.c.h.b16 %v341
  %v1008 = vunpack.c.l.b16 %v342
  %v1009 = vunpack.c.l.b16 %v343
  %v1010 = vunpack.c.h.b16 %v343
  %v1011 = vunpack.c.l.b16 %v344
  %v1012 = vunpack.c.h.b16 %v344
  %v1013 = vunpack.c.l.b16 %v345
  %v1014 = vunpack.c.h.b16 %v345
  %v1015 = vunpack.c.l.b16 %v346
  %v1016 = vunpack.c.l.b16 %v347
  %v1017 = vunpack.c.h.b16 %v347
  %v1018 = vunpack.c.l.b16 %v348
  %v1019 = vunpack.c.h.b16 %v348
  %v1020 = vunpack.c.l.b16 %v349
  %v1021 = vunpack.c.h.b16 %v349
  %v1022 = vunpack.c.l.b16 %v350
  %v1023 = vunpack.c.l.b16 %v351
  %v1024 = vunpack.c.h.b16 %v351
  %v1025 = vunpack.c.l.b16 %v352
  %v1026 = vunpack.c.h.b16 %v352
  %v1027 = vunpack.c.l.b16 %v353
  %v1028 = vunpack.c.h.b16 %v353
  %v1029 = vunpack.c.l.b16 %v354
  %v1030 = vunpack.c.l.b16 %v355
  %v1031 = vunpack.c.h.b16 %v355
  %v1032 = vunpack.c.l.b16 %v356
  %v1033 = vunpack.c.h.b16 %v356
  %v1034 = vunpack.c.l.b16 %v357
  %v1035 = vunpack.c.h.b16 %v357
  %v1036 = vunpack.c.l.b16 %v358
  %v1037 = vunpack.c.l.b16 %v359
  %v1038 = vunpack.c.h.b16 %v359
  %v1039 = vunpack.c.l.b16 %v360
  %v1040 = vunpack.c.h.b16 %v360
  %v1041 = vunpack.c.l.b16 %v361
  %v1042 = vunpack.c.h.b16 %v361
  %v1043 = vunpack.c.l.b16 %v362
  %v1044 = vunpack.c.l.b16 %v363
  %v1045 = vunpack.c.h.b16 %v363
  %v1046 = vunpack.c.l.b16 %v364
  %v1047 = vunpack.c.h.b16 %v364
  %v1048 = vunpack.c.l.b16 %v365
  %v1049 = vunpack.c.h.b16 %v365
  %v1050 = vunpack.c.l.b16 %v366
  %v1051 = vunpack.c.l.b16 %v367
  %v1052 = vunpack.c.h.b16 %v367
  %v1053 = vunpack.c.l.b16 %v368
  %v1054 = vunpack.c.h.b16 %v368
  %v1055 = vunpack.c.l.b16 %v369
  %v1056 = vunpack.c.h.b16 %v369
  %v1057 = vunpack.c.l.b16 %v370
  %v1058 = vunpack.c.l.b16 %v371
  %v1059 = vunpack.c.h.b16 %v371
  %v1060 = vunpack.c.l.b16 %v372
  %v1061 = vunpack.c.h.b16 %v372
  %v1062 = vunpack.c.l.b16 %v373
  %v1063 = vunpack.c.h.b16 %v373
  %v1064 = vunpack.c.l.b16 %v374
  %v1065 = vunpack.c.l.b16 %v375
  %v1066 = vunpack.c.h.b16 %v375
  %v1067 = vunpack.c.l.b16 %v376
  %v1068 = vunpack.c.h.b16 %v376
  %v1069 = vunpack.c.l.b16 %v377
  %v1070 = vunpack.c.h.b16 %v377
  %v1071 = vunpack.c.l.b16 %v378
  %v1072 = vunpack.c.l.b16 %v379
  %v1073 = vunpack.c.h.b16 %v379
  %v1074 = vunpack.c.l.b16 %v380
  %v1075 = vunpack.c.h.b16 %v380
  %v1076 = vunpack.c.l.b16 %v381
  %v1077 = vunpack.c.h.b16 %v381
  %v1078 = vunpack.c.l.b16 %v382
  %v1079 = vunpack.c.l.b16 %v383
  %v1080 = vunpack.c.h.b16 %v383
  %v1081 = vunpack.c.l.b16 %v384
  %v1082 = vunpack.c.h.b16 %v384
  %v1083 = vunpack.c.l.b16 %v385
  %v1084 = vunpack.c.h.b16 %v385
  %v1085 = vunpack.c.l.b16 %v386
  %v1086 = vunpack.c.l.b16 %v387
  %v1087 = vunpack.c.h.b16 %v387
  %v1088 = vunpack.c.l.b16 %v388
  %v1089 = vunpack.c.h.b16 %v388
  %v1090 = vunpack.c.l.b16 %v389
  %v1091 = vunpack.c.h.b16 %v389
  %v1092 = vunpack.c.l.b16 %v390
  %v1093 = vunpack.c.l.b16 %v391
  %v1094 = vunpack.c.h.b16 %v391
  %v1095 = vunpack.c.l.b16 %v392
  %v1096 = vunpack.c.h.b16 %v392
  %v1097 = vunpack.c.l.b16 %v393
  %v1098 = vunpack.c.h.b16 %v393
  %v1099 = vunpack.c.l.b16 %v394
  %v1100 = vunpack.c.l.b16 %v395
  %v1101 = vunpack.c.h.b16 %v395
  %v1102 = vunpack.c.l.b16 %v396
  %v1103 = vunpack.c.h.b16 %v396
  %v1104 = vunpack.c.l.b16 %v397
  %v1105 = vunpack.c.h.b16 %v397
  %v1106 = vunpack.c.l.b16 %v398
  %v1107 = vunpack.c.l.b16 %v399
  %v1108 = vunpack.c.h.b16 %v399
  %v1109 = vunpack.c.l.b16 %v400
  %v1110 = vunpack.c.h.b16 %v400
  %v1111 = vunpack.c.l.b16 %v401
  %v1112 = vunpack.c.h.b16 %v401
  %v1113 = vunpack.c.l.b16 %v402
  %v1114 = vunpack.c.l.b16 %v403
  %v1115 = vunpack.c.h.b16 %v403
  %v1116 = vunpack.c.l.b16 %v404
  %v1117 = vunpack.c.h.b16 %v404
  %v1118 = vunpack.c.l.b16 %v405
  %v1119 = vunpack.c.h.b16 %v405
  %v1120 = vunpack.c.l.b16 %v406
  %v1121 = vunpack.c.l.b16 %v407
  %v1122 = vunpack.c.h.b16 %v407
  %v1123 = vunpack.c.l.b16 %v408
  %v1124 = vunpack.c.h.b16 %v408
  %v1125 = vunpack.c.l.b16 %v409
  %v1126 = vunpack.c.h.b16 %v409
  %v1127 = vunpack.c.l.b16 %v410
  %v1128 = vunpack.c.l.b16 %v411
  %v1129 = vunpack.c.h.b16 %v411
  %v1130 = vunpack.c.l.b16 %v412
  %v1131 = vunpack.c.h.b16 %v412
  %v1132 = vunpack.c.l.b16 %v413
  %v1133 = vunpack.c.h.b16 %v413
  %v1134 = vunpack.c.l.b16 %v414
  %v1135 = vunpack.c.l.b16 %v415
  %v1136 = vunpack.c.h.b16 %v415
  %v1137 = vunpack.c.l.b16 %v416
  %v1138 = vunpack.c.h.b16 %v416
  %v1139 = vunpack.c.l.b16 %v417
  %v1140 = vunpack.c.h.b16 %v417
  %v1141 = vunpack.c.l.b16 %v418
  %v1142 = vunpack.c.l.b16 %v419
  %v1143 = vunpack.c.h.b16 %v419
  %v1144 = vunpack.c.l.b16 %v420
  %v1145 = vunpack.c.h.b16 %v420
  %v1146 = vunpack.c.l.b16 %v421
  %v1147 = vunpack.c.h.b16 %v421
  %v1148 = vunpack.c.l.b16 %v422
  %v1149 = vunpack.c.l.b16 %v423
  %v1150 = vunpack.c.h.b16 %v423
  %v1151 = vunpack.c.l.b16 %v424
  %v1152 = vunpack.c.h.b16 %v424
  %v1153 = vunpack.c.l.b16 %v425
  %v1154 = vunpack.c.h.b16 %v425
  %v1155 = vunpack.c.l.b16 %v426
  %v1156 = vunpack.c.l.b16 %v427
  %v1157 = vunpack.c.h.b16 %v427
  %v1158 = vunpack.c.l.b16 %v428
  %v1159 = vunpack.c.h.b16 %v428
  %v1160 = vunpack.c.l.b16 %v429
  %v1161 = vunpack.c.h.b16 %v429
  %v1162 = vunpack.c.l.b16 %v430
  %v1163 = vunpack.c.l.b16 %v431
  %v1164 = vunpack.c.h.b16 %v431
  %v1165 = vunpack.c.l.b16 %v432
  %v1166 = vunpack.c.h.b16 %v432
  %v1167 = vunpack.c.l.b16 %v433
  %v1168 = vunpack.c.h.b16 %v433
  %v1169 = vunpack.c.l.b16 %v434
  %v1170 = vunpack.c.l.b16 %v435
  %v1171 = vunpack.c.h.b16 %v435
  %v1172 = vunpack.c.l.b16 %v436
  %v1173 = vunpack.c.h.b16 %v436
  %v1174 = vunpack.c.l.b16 %v437
  %v1175 = vunpack.c.h.b16 %v437
  %v1176 = vunpack.c.l.b16 %v438
  %v1177 = vunpack.c.l.b16 %v439
  %v1178 = vunpack.c.h.b16 %v439
  %v1179 = vunpack.c.l.b16 %v440
  %v1180 = vunpack.c.h.b16 %v440
  %v1181 = vunpack.c.l.b16 %v441
  %v1182 = vunpack.c.h.b16 %v441
  %v1183 = vunpack.c.l.b16 %v442
  %v1184 = vpack.c.b16 %v743, %v736
  %v1185 = vpack.c.b16 %v744, %v737
  %v1186 = vpack.c.b16 %v745, %v738
  %v1187 = vpack.c.b16 %v746, %v739
  %v1188 = vpack.c.b16 %v747, %v740
  %v1189 = vpack.c.b16 %v748, %v741
  %v1190 = vpack.c.b16 %v749, %v742
  %v1191 = vpack.c.b16 %v757, %v750
  %v1192 = vpack.c.b16 %v758, %v751
  %v1193 = vpack.c.b16 %v759, %v752
  %v1194 = vpack.c.b16 %v760, %v753
  %v1195 = vpack.c.b16 %v761, %v754
  %v1196 = vpack.c.b16 %v762, %v755
  %v1197 = vpack.c.b16 %v763, %v756
  %v1198 = vpack.c.b16 %v771, %v764
  %v1199 = vpack.c.b16 %v772, %v765
  %v1200 = vpack.c.b16 %v773, %v766
  %v1201 = vpack.c.b16 %v774, %v767
  %v1202 = vpack.c.b16 %v775, %v768
  %v1203 = vpack.c.b16 %v776, %v769
  %v1204 = vpack.c.b16 %v777, %v770
  %v1205 = vpack.c.b16 %v785, %v778
  %v1206 = vpack.c.b16 %v786, %v779
  %v1207 = vpack.c.b16 %v787, %v780
  %v1208 = vpack.c.b16 %v788, %v781
  %v1209 = vpack.c.b16 %v789, %v782
  %v1210 = vpack.c.b16 %v790, %v783
  %v1211 = vpack.c.b16 %v791, %v784
  %v1212 = vpack.c.b16 %v799, %v792
  %v1213 = vpack.c.b16 %v800, %v793
  %v1214 = vpack.c.b16 %v801, %v794
  %v1215 = vpack.c.b16 %v802, %v795
  %v1216 = vpack.c.b16 %v803, %v796
  %v1217 = vpack.c.b16 %v804, %v797
  %v1218 = vpack.c.b16 %v805, %v798
  %v1219 = vpack.c.b16 %v813, %v806
  %v1220 = vpack.c.b16 %v814, %v807
  %v1221 = vpack.c.b16 %v815, %v808
  %v1222 = vpack.c.b16 %v816, %v809
  %v1223 = vpack.c.b16 %v817, %v810
  %v1224 = vpack.c.b16 %v818, %v811
  %v1225 = vpack.c.b16 %v819, %v812
  %v1226 = vpack.c.b16 %v827, %v820
  %v1227 = vpack.c.b16 %v828, %v821
  %v1228 = vpack.c.b16 %v829, %v822
  %v1229 = vpack.c.b16 %v830, %v823
  %v1230 = vpack.c.b16 %v831, %v824
  %v1231 = vpack.c.b16 %v832, %v825
  %v1232 = vpack.c.b16 %v833, %v826
  %v1233 = vpack.c.b16 %v841, %v834
  %v1234 = vpack.c.b16 %v842, %v835
  %v1235 = vpack.c.b16 %v843, %v836
  %v1236 = vpack.c.b16 %v844, %v837
  %v1237 = vpack.c.b16 %v845, %v838
  %v1238 = vpack.c.b16 %v846, %v839
  %v1239 = vpack.c.b16 %v847, %v840
  %v1240 = vpack.c.b16 %v855, %v848
  %v1241 = vpack.c.b16 %v856, %v849
  %v1242 = vpack.c.b16 %v857, %v850
  %v1243 = vpack.c.b16 %v858, %v851
  %v1244 = vpack.c.b16 %v859, %v852
  %v1245 = vpack.c.b16 %v860, %v853
  %v1246 = vpack.c.b16 %v861, %v854
  %v1247 = vpack.c.b16 %v869, %v862
  %v1248 = vpack.c.b16 %v870, %v863
  %v1249 = vpack.c.b16 %v871, %v864
  %v1250 = vpack.c.b16 %v872, %v865
  %v1251 = vpack.c.b16 %v873, %v866
  %v1252 = vpack.c.b16 %v874, %v867
  %v1253 = vpack.c.b16 %v875, %v868
  %v1254 = vpack.c.b16 %v883, %v876
  %v1255 = vpack.c.b16 %v884, %v877
  %v1256 = vpack.c.b16 %v885, %v878
  %v1257 = vpack.c.b16 %v886, %v879
  %v1258 = vpack.c.b16 %v887, %v880
  %v1259 = vpack.c.b16 %v888, %v881
  %v1260 = vpack.c.b16 %v889, %v882
  %v1261 = vpack.c.b16 %v897, %v890
  %v1262 = vpack.c.b16 %v898, %v891
  %v1263 = vpack.c.b16 %v899, %v892
  %v1264 = vpack.c.b16 %v900, %v893
  %v1265 = vpack.c.b16 %v901, %v894
  %v1266 = vpack.c.b16 %v902, %v895
  %v1267 = vpack.c.b16 %v903, %v896
  %v1268 = vpack.c.b16 %v911, %v904
  %v1269 = vpack.c.b16 %v912, %v905
  %v1270 = vpack.c.b16 %v913, %v906
  %v1271 = vpack.c.b16 %v914, %v907
  %v1272 = vpack.c.b16 %v915, %v908
  %v1273 = vpack.c.b16 %v916, %v909
  %v1274 = vpack.c.b16 %v917, %v910
  %v1275 = vpack.c.b16 %v925, %v918
  %v1276 = vpack.c.b16 %v926, %v919
  %v1277 = vpack.c.b16 %v927, %v920
  %v1278 = vpack.c.b16 %v928, %v921
  %v1279 = vpack.c.b16 %v929, %v922
  %v1280 = vpack.c.b16 %v930, %v923
  %v1281 = vpack.c.b16 %v931, %v924
  %v1282 = vpack.c.b16 %v939, %v932
  %v1283 = vpack.c.b16 %v940, %v933
  %v1284 = vpack.c.b16 %v941, %v934
  %v1285 = vpack.c.b16 %v942, %v935
  %v1286 = vpack.c.b16 %v943, %v936
  %v1287 = vpack.c.b16 %v944, %v937
  %v1288 = vpack.c.b16 %v945, %v938
  %v1289 = vpack.c.b16 %v953, %v946
  %v1290 = vpack.c.b16 %v954, %v947
  %v1291 = vpack.c.b16 %v955, %v948
  %v1292 = vpack.c.b16 %v956, %v949
  %v1293 = vpack.c.b16 %v957, %v950
  %v1294 = vpack.c.b16 %v958, %v951
  %v1295 = vpack.c.b16 %v959, %v952
  %v1296 = vpack.c.b16 %v967, %v960
  %v1297 = vpack.c.b16 %v968, %v961
  %v1298 = vpack.c.b16 %v969, %v962
  %v1299 = vpack.c.b16 %v970, %v963
  %v1300 = vpack.c.b16 %v971, %v964
  %v1301 = vpack.c.b16 %v972, %v965
  %v1302 = vpack.c.b16 %v973, %v966
  %v1303 = vpack.c.b16 %v981, %v974
  %v1304 = vpack.c.b16 %v982, %v975
  %v1305 = vpack.c.b16 %v983, %v976
  %v1306 = vpack.c.b16 %v984, %v977
  %v1307 = vpack.c.b16 %v985, %v978
  %v1308 = vpack.c.b16 %v986, %v979
  %v1309 = vpack.c.b16 %v987, %v980
  %v1310 = vpack.c.b16 %v995, %v988
  %v1311 = vpack.c.b16 %v996, %v989
  %v1312 = vpack.c.b16 %v997, %v990
  %v1313 = vpack.c.b16 %v998, %v991
  %v1314 = vpack.c.b16 %v999, %v992
  %v1315 = vpack.c.b16 %v1000, %v993
  %v1316 = vpack.c.b16 %v1001, %v994
  %v1317 = vpack.c.b16 %v1009, %v1002
  %v1318 = vpack.c.b16 %v1010, %v1003
  %v1319 = vpack.c.b16 %v1011, %v1004
  %v1320 = vpack.c.b16 %v1012, %v1005
  %v1321 = vpack.c.b16 %v1013, %v1006
  %v1322 = vpack.c.b16 %v1014, %v1007
  %v1323 = vpack.c.b16 %v1015, %v1008
  %v1324 = vpack.c.b16 %v1023, %v1016
  %v1325 = vpack.c.b16 %v1024, %v1017
  %v1326 = vpack.c.b16 %v1025, %v1018
  %v1327 = vpack.c.b16 %v1026, %v1019
  %v1328 = vpack.c.b16 %v1027, %v1020
  %v1329 = vpack.c.b16 %v1028, %v1021
  %v1330 = vpack.c.b16 %v1029, %v1022
  %v1331 = vpack.c.b16 %v1037, %v1030
  %v1332 = vpack.c.b16 %v1038, %v1031
  %v1333 = vpack.c.b16 %v1039, %v1032
  %v1334 = vpack.c.b16 %v1040, %v1033
  %v1335 = vpack.c.b16 %v1041, %v1034
  %v1336 = vpack.c.b16 %v1042, %v1035
  %v1337 = vpack.c.b16 %v1043, %v1036
  %v1338 = vpack.c.b16 %v1051, %v1044
  %v1339 = vpack.c.b16 %v1052, %v1045
  %v1340 = vpack.c.b16 %v1053, %v1046
  %v1341 = vpack.c.b16 %v1054, %v1047
  %v1342 = vpack.c.b16 %v1055, %v1048
  %v1343 = vpack.c.b16 %v1056, %v1049
  %v1344 = vpack.c.b16 %v1057, %v1050
  %v1345 = vpack.c.b16 %v1065, %v1058
  %v1346 = vpack.c.b16 %v1066, %v1059
  %v1347 = vpack.c.b16 %v1067, %v1060
  %v1348 = vpack.c.b16 %v1068, %v1061
  %v1349 = vpack.c.b16 %v1069, %v1062
  %v1350 = vpack.c.b16 %v1070, %v1063
  %v1351 = vpack.c.b16 %v1071, %v1064
  %v1352 = vpack.c.b16 %v1079, %v1072
  %v1353 = vpack.c.b16 %v1080, %v1073
  %v1354 = vpack.c.b16 %v1081, %v1074
  %v1355 = vpack.c.b16 %v1082, %v1075
  %v1356 = vpack.c.b16 %v1083, %v1076
  %v1357 = vpack.c.b16 %v1084, %v1077
  %v1358 = vpack.c.b16 %v1085, %v1078
  %v1359 = vpack.c.b16 %v1093, %v1086
  %v1360 = vpack.c.b16 %v1094, %v1087
  %v1361 = vpack.c.b16 %v1095, %v1088
  %v1362 = vpack.c.b16 %v1096, %v1089
  %v1363 = vpack.c.b16 %v1097, %v1090
  %v1364 = vpack.c.b16 %v1098, %v1091
  %v1365 = vpack.c.b16 %v1099, %v1092
  %v1366 = vpack.c.b16 %v1107, %v1100
  %v1367 = vpack.c.b16 %v1108, %v1101
  %v1368 = vpack.c.b16 %v1109, %v1102
  %v1369 = vpack.c.b16 %v1110, %v1103
  %v1370 = vpack.c.b16 %v1111, %v1104
  %v1371 = vpack.c.b16 %v1112, %v1105
  %v1372 = vpack.c.b16 %v1113, %v1106
  %v1373 = vpack.c.b16 %v1121, %v1114
  %v1374 = vpack.c.b16 %v1122, %v1115
  %v1375 = vpack.c.b16 %v1123, %v1116
  %v1376 = vpack.c.b16 %v1124, %v1117
  %v1377 = vpack.c.b16 %v1125, %v1118
  %v1378 = vpack.c.b16 %v1126, %v1119
  %v1379 = vpack.c.b16 %v1127, %v1120
  %v1380 = vpack.c.b16 %v1135, %v1128
  %v1381 = vpack.c.b16 %v1136, %v1129
  %v1382 = vpack.c.b16 %v1137, %v1130
  %v1383 = vpack.c.b16 %v1138, %v1131
  %v1384 = vpack.c.b16 %v1139, %v1132
  %v1385 = vpack.c.b16 %v1140, %v1133
  %v1386 = vpack.c.b16 %v1141, %v1134
  %v1387 = vpack.c.b16 %v1149, %v1142
  %v1388 = vpack.c.b16 %v1150, %v1143
  %v1389 = vpack.c.b16 %v1151, %v1144
  %v1390 = vpack.c.b16 %v1152, %v1145
  %v1391 = vpack.c.b16 %v1153, %v1146
  %v1392 = vpack.c.b16 %v1154, %v1147
  %v1393 = vpack.c.b16 %v1155, %v1148
  %v1394 = vpack.c.b16 %v1163, %v1156
  %v1395 = vpack.c.b16 %v1164, %v1157
  %v1396 = vpack.c.b16 %v1165, %v1158
  %v1397 = vpack.c.b16 %v1166, %v1159
  %v1398 = vpack.c.b16 %v1167, %v1160
  %v1399 = vpack.c.b16 %v1168, %v1161
  %v1400 = vpack.c.b16 %v1169, %v1162
  %v1401 = vpack.c.b16 %v1177, %v1170
  %v1402 = vpack.c.b16 %v1178, %v1171
  %v1403 = vpack.c.b16 %v1179, %v1172
  %v1404 = vpack.c.b16 %v1180, %v1173
  %v1405 = vpack.c.b16 %v1181, %v1174
  %v1406 = vpack.c.b16 %v1182, %v1175
  %v1407 = vpack.c.b16 %v1183, %v1176
  %1632 = vmatprep.subr.bf16.mxu0 %v1185
  %1633 = vmatpush1.bf16.msra.mxu0 %v1184
  %1634 = vmatprep.subr.bf16.mxu0 %v1192
  %1635 = vmatpush1.bf16.msra.mxu0 %v1191
  %1636 = vmatprep.subr.bf16.mxu0 %v1199
  %1637 = vmatpush1.bf16.msra.mxu0 %v1198
  %1638 = vmatprep.subr.bf16.mxu0 %v1206
  %1639 = vmatpush1.bf16.msra.mxu0 %v1205
  %1640 = vmatprep.subr.bf16.mxu0 %v1213
  %1641 = vmatpush1.bf16.msra.mxu0 %v1212
  %1642 = vmatprep.subr.bf16.mxu0 %v1220
  %1643 = vmatpush1.bf16.msra.mxu0 %v1219
  %1644 = vmatprep.subr.bf16.mxu0 %v1227
  %1645 = vmatpush1.bf16.msra.mxu0 %v1226
  %1646 = vmatprep.subr.bf16.mxu0 %v1234
  %1647 = vmatpush1.bf16.msra.mxu0 %v1233
  %1648 = vmatprep.subr.bf16.mxu0 %v1241
  %1649 = vmatpush1.bf16.msra.mxu0 %v1240
  %1650 = vmatprep.subr.bf16.mxu0 %v1248
  %1651 = vmatpush1.bf16.msra.mxu0 %v1247
  %1652 = vmatprep.subr.bf16.mxu0 %v1255
  %1653 = vmatpush1.bf16.msra.mxu0 %v1254
  %1654 = vmatprep.subr.bf16.mxu0 %v1262
  %1655 = vmatpush1.bf16.msra.mxu0 %v1261
  %1656 = vmatprep.subr.bf16.mxu0 %v1269
  %1657 = vmatpush1.bf16.msra.mxu0 %v1268
  %1658 = vmatprep.subr.bf16.mxu0 %v1276
  %1659 = vmatpush1.bf16.msra.mxu0 %v1275
  %1660 = vmatprep.subr.bf16.mxu0 %v1283
  %1661 = vmatpush1.bf16.msra.mxu0 %v1282
  %1662 = vmatprep.subr.bf16.mxu0 %v1290
  %1663 = vmatpush1.bf16.msra.mxu0 %v1289
  %1664 = vmatprep.mubr.bf16.mxu0 %v184
  %1665 = vmatmul.mubr.bf16.gmra.mrb[0].mxu0 %v183
  %v1666 = vpop.f32.mrb[0].mxu0
  %v1667 = vadd.f32 %v448, %v1666
  %v1668 = vpop.f32.mrb[0].mxu0
  %v1669 = vadd.f32 %v452, %v1668
  %v1670 = vpop.f32.mrb[0].mxu0
  %v1671 = vpop.f32.mrb[0].mxu0
  %1672 = vdwg.mxu0
  %1673 = vmatprep.subr.bf16.mxu0 %v1297
  %1674 = vmatpush1.bf16.msra.mxu0 %v1296
  %1675 = vmatprep.subr.bf16.mxu0 %v1304
  %1676 = vmatpush1.bf16.msra.mxu0 %v1303
  %1677 = vmatprep.subr.bf16.mxu0 %v1311
  %1678 = vmatpush1.bf16.msra.mxu0 %v1310
  %1679 = vmatprep.subr.bf16.mxu0 %v1318
  %1680 = vmatpush1.bf16.msra.mxu0 %v1317
  %1681 = vmatprep.subr.bf16.mxu0 %v1325
  %1682 = vmatpush1.bf16.msra.mxu0 %v1324
  %1683 = vmatprep.subr.bf16.mxu0 %v1332
  %1684 = vmatpush1.bf16.msra.mxu0 %v1331
  %1685 = vmatprep.subr.bf16.mxu0 %v1339
  %1686 = vmatpush1.bf16.msra.mxu0 %v1338
  %1687 = vmatprep.subr.bf16.mxu0 %v1346
  %1688 = vmatpush1.bf16.msra.mxu0 %v1345
  %1689 = vmatprep.subr.bf16.mxu0 %v1353
  %1690 = vmatpush1.bf16.msra.mxu0 %v1352
  %1691 = vmatprep.subr.bf16.mxu0 %v1360
  %1692 = vmatpush1.bf16.msra.mxu0 %v1359
  %1693 = vmatprep.subr.bf16.mxu0 %v1367
  %1694 = vmatpush1.bf16.msra.mxu0 %v1366
  %1695 = vmatprep.subr.bf16.mxu0 %v1374
  %1696 = vmatpush1.bf16.msra.mxu0 %v1373
  %1697 = vmatprep.subr.bf16.mxu0 %v1381
  %1698 = vmatpush1.bf16.msra.mxu0 %v1380
  %1699 = vmatprep.subr.bf16.mxu0 %v1388
  %1700 = vmatpush1.bf16.msra.mxu0 %v1387
  %1701 = vmatprep.subr.bf16.mxu0 %v1395
  %1702 = vmatpush1.bf16.msra.mxu0 %v1394
  %1703 = vmatprep.subr.bf16.mxu0 %v1402
  %1704 = vmatpush1.bf16.msra.mxu0 %v1401
  %1705 = vmatprep.mubr.bf16.mxu0 %v186
  %1706 = vmatmul.mubr.bf16.gmra.mrb[0].mxu0 %v185
  %v1707 = vpop.f32.mrb[0].mxu0
  %v1708 = vadd.f32 %v1667, %v1707
  %v1709 = vpop.f32.mrb[0].mxu0
  %v1710 = vadd.f32 %v1669, %v1709
  %v1711 = vpop.f32.mrb[0].mxu0
  %v1712 = vpop.f32.mrb[0].mxu0
  %1713 = vdwg.mxu0
  %1714 = vmatprep.subr.bf16.mxu0 %v1187
  %1715 = vmatpush1.bf16.msra.mxu0 %v1186
  %1716 = vmatprep.subr.bf16.mxu0 %v1194
  %1717 = vmatpush1.bf16.msra.mxu0 %v1193
  %1718 = vmatprep.subr.bf16.mxu0 %v1201
  %1719 = vmatpush1.bf16.msra.mxu0 %v1200
  %1720 = vmatprep.subr.bf16.mxu0 %v1208
  %1721 = vmatpush1.bf16.msra.mxu0 %v1207
  %1722 = vmatprep.subr.bf16.mxu0 %v1215
  %1723 = vmatpush1.bf16.msra.mxu0 %v1214
  %1724 = vmatprep.subr.bf16.mxu0 %v1222
  %1725 = vmatpush1.bf16.msra.mxu0 %v1221
  %1726 = vmatprep.subr.bf16.mxu0 %v1229
  %1727 = vmatpush1.bf16.msra.mxu0 %v1228
  %1728 = vmatprep.subr.bf16.mxu0 %v1236
  %1729 = vmatpush1.bf16.msra.mxu0 %v1235
  %1730 = vmatprep.subr.bf16.mxu0 %v1243
  %1731 = vmatpush1.bf16.msra.mxu0 %v1242
  %1732 = vmatprep.subr.bf16.mxu0 %v1250
  %1733 = vmatpush1.bf16.msra.mxu0 %v1249
  %1734 = vmatprep.subr.bf16.mxu0 %v1257
  %1735 = vmatpush1.bf16.msra.mxu0 %v1256
  %1736 = vmatprep.subr.bf16.mxu0 %v1264
  %1737 = vmatpush1.bf16.msra.mxu0 %v1263
  %1738 = vmatprep.subr.bf16.mxu0 %v1271
  %1739 = vmatpush1.bf16.msra.mxu0 %v1270
  %1740 = vmatprep.subr.bf16.mxu0 %v1278
  %1741 = vmatpush1.bf16.msra.mxu0 %v1277
  %1742 = vmatprep.subr.bf16.mxu0 %v1285
  %1743 = vmatpush1.bf16.msra.mxu0 %v1284
  %1744 = vmatprep.subr.bf16.mxu0 %v1292
  %1745 = vmatpush1.bf16.msra.mxu0 %v1291
  %1746 = vmatprep.mubr.bf16.mxu0 %v184
  %1747 = vmatmul.mubr.bf16.gmra.mrb[0].mxu0 %v183
  %v1748 = vpop.f32.mrb[0].mxu0
  %v1749 = vadd.f32 %v456, %v1748
  %v1750 = vpop.f32.mrb[0].mxu0
  %v1751 = vadd.f32 %v460, %v1750
  %v1752 = vpop.f32.mrb[0].mxu0
  %v1753 = vpop.f32.mrb[0].mxu0
  %1754 = vdwg.mxu0
  %1755 = vmatprep.subr.bf16.mxu0 %v1299
  %1756 = vmatpush1.bf16.msra.mxu0 %v1298
  %1757 = vmatprep.subr.bf16.mxu0 %v1306
  %1758 = vmatpush1.bf16.msra.mxu0 %v1305
  %1759 = vmatprep.subr.bf16.mxu0 %v1313
  %1760 = vmatpush1.bf16.msra.mxu0 %v1312
  %1761 = vmatprep.subr.bf16.mxu0 %v1320
  %1762 = vmatpush1.bf16.msra.mxu0 %v1319
  %1763 = vmatprep.subr.bf16.mxu0 %v1327
  %1764 = vmatpush1.bf16.msra.mxu0 %v1326
  %1765 = vmatprep.subr.bf16.mxu0 %v1334
  %1766 = vmatpush1.bf16.msra.mxu0 %v1333
  %1767 = vmatprep.subr.bf16.mxu0 %v1341
  %1768 = vmatpush1.bf16.msra.mxu0 %v1340
  %1769 = vmatprep.subr.bf16.mxu0 %v1348
  %1770 = vmatpush1.bf16.msra.mxu0 %v1347
  %1771 = vmatprep.subr.bf16.mxu0 %v1355
  %1772 = vmatpush1.bf16.msra.mxu0 %v1354
  %1773 = vmatprep.subr.bf16.mxu0 %v1362
  %1774 = vmatpush1.bf16.msra.mxu0 %v1361
  %1775 = vmatprep.subr.bf16.mxu0 %v1369
  %1776 = vmatpush1.bf16.msra.mxu0 %v1368
  %1777 = vmatprep.subr.bf16.mxu0 %v1376
  %1778 = vmatpush1.bf16.msra.mxu0 %v1375
  %1779 = vmatprep.subr.bf16.mxu0 %v1383
  %1780 = vmatpush1.bf16.msra.mxu0 %v1382
  %1781 = vmatprep.subr.bf16.mxu0 %v1390
  %1782 = vmatpush1.bf16.msra.mxu0 %v1389
  %1783 = vmatprep.subr.bf16.mxu0 %v1397
  %1784 = vmatpush1.bf16.msra.mxu0 %v1396
  %1785 = vmatprep.subr.bf16.mxu0 %v1404
  %1786 = vmatpush1.bf16.msra.mxu0 %v1403
  %1787 = vmatprep.mubr.bf16.mxu0 %v186
  %1788 = vmatmul.mubr.bf16.gmra.mrb[0].mxu0 %v185
  %v1789 = vpop.f32.mrb[0].mxu0
  %v1790 = vadd.f32 %v1749, %v1789
  %v1791 = vpop.f32.mrb[0].mxu0
  %v1792 = vadd.f32 %v1751, %v1791
  %v1793 = vpop.f32.mrb[0].mxu0
  %v1794 = vpop.f32.mrb[0].mxu0
  %1795 = vdwg.mxu0
  %1796 = vmatprep.subr.bf16.mxu0 %v1189
  %1797 = vmatpush1.bf16.msra.mxu0 %v1188
  %1798 = vmatprep.subr.bf16.mxu0 %v1196
  %1799 = vmatpush1.bf16.msra.mxu0 %v1195
  %1800 = vmatprep.subr.bf16.mxu0 %v1203
  %1801 = vmatpush1.bf16.msra.mxu0 %v1202
  %1802 = vmatprep.subr.bf16.mxu0 %v1210
  %1803 = vmatpush1.bf16.msra.mxu0 %v1209
  %1804 = vmatprep.subr.bf16.mxu0 %v1217
  %1805 = vmatpush1.bf16.msra.mxu0 %v1216
  %1806 = vmatprep.subr.bf16.mxu0 %v1224
  %1807 = vmatpush1.bf16.msra.mxu0 %v1223
  %1808 = vmatprep.subr.bf16.mxu0 %v1231
  %1809 = vmatpush1.bf16.msra.mxu0 %v1230
  %1810 = vmatprep.subr.bf16.mxu0 %v1238
  %1811 = vmatpush1.bf16.msra.mxu0 %v1237
  %1812 = vmatprep.subr.bf16.mxu0 %v1245
  %1813 = vmatpush1.bf16.msra.mxu0 %v1244
  %1814 = vmatprep.subr.bf16.mxu0 %v1252
  %1815 = vmatpush1.bf16.msra.mxu0 %v1251
  %1816 = vmatprep.subr.bf16.mxu0 %v1259
  %1817 = vmatpush1.bf16.msra.mxu0 %v1258
  %1818 = vmatprep.subr.bf16.mxu0 %v1266
  %1819 = vmatpush1.bf16.msra.mxu0 %v1265
  %1820 = vmatprep.subr.bf16.mxu0 %v1273
  %1821 = vmatpush1.bf16.msra.mxu0 %v1272
  %1822 = vmatprep.subr.bf16.mxu0 %v1280
  %1823 = vmatpush1.bf16.msra.mxu0 %v1279
  %1824 = vmatprep.subr.bf16.mxu0 %v1287
  %1825 = vmatpush1.bf16.msra.mxu0 %v1286
  %1826 = vmatprep.subr.bf16.mxu0 %v1294
  %1827 = vmatpush1.bf16.msra.mxu0 %v1293
  %1828 = vmatprep.mubr.bf16.mxu0 %v184
  %1829 = vmatmul.mubr.bf16.gmra.mrb[0].mxu0 %v183
  %v1830 = vpop.f32.mrb[0].mxu0
  %v1831 = vadd.f32 %v464, %v1830
  %v1832 = vpop.f32.mrb[0].mxu0
  %v1833 = vadd.f32 %v468, %v1832
  %v1834 = vpop.f32.mrb[0].mxu0
  %v1835 = vpop.f32.mrb[0].mxu0
  %1836 = vdwg.mxu0
  %1837 = vmatprep.subr.bf16.mxu0 %v1301
  %1838 = vmatpush1.bf16.msra.mxu0 %v1300
  %1839 = vmatprep.subr.bf16.mxu0 %v1308
  %1840 = vmatpush1.bf16.msra.mxu0 %v1307
  %1841 = vmatprep.subr.bf16.mxu0 %v1315
  %1842 = vmatpush1.bf16.msra.mxu0 %v1314
  %1843 = vmatprep.subr.bf16.mxu0 %v1322
  %1844 = vmatpush1.bf16.msra.mxu0 %v1321
  %1845 = vmatprep.subr.bf16.mxu0 %v1329
  %1846 = vmatpush1.bf16.msra.mxu0 %v1328
  %1847 = vmatprep.subr.bf16.mxu0 %v1336
  %1848 = vmatpush1.bf16.msra.mxu0 %v1335
  %1849 = vmatprep.subr.bf16.mxu0 %v1343
  %1850 = vmatpush1.bf16.msra.mxu0 %v1342
  %1851 = vmatprep.subr.bf16.mxu0 %v1350
  %1852 = vmatpush1.bf16.msra.mxu0 %v1349
  %1853 = vmatprep.subr.bf16.mxu0 %v1357
  %1854 = vmatpush1.bf16.msra.mxu0 %v1356
  %1855 = vmatprep.subr.bf16.mxu0 %v1364
  %1856 = vmatpush1.bf16.msra.mxu0 %v1363
  %1857 = vmatprep.subr.bf16.mxu0 %v1371
  %1858 = vmatpush1.bf16.msra.mxu0 %v1370
  %1859 = vmatprep.subr.bf16.mxu0 %v1378
  %1860 = vmatpush1.bf16.msra.mxu0 %v1377
  %1861 = vmatprep.subr.bf16.mxu0 %v1385
  %1862 = vmatpush1.bf16.msra.mxu0 %v1384
  %1863 = vmatprep.subr.bf16.mxu0 %v1392
  %1864 = vmatpush1.bf16.msra.mxu0 %v1391
  %1865 = vmatprep.subr.bf16.mxu0 %v1399
  %1866 = vmatpush1.bf16.msra.mxu0 %v1398
  %1867 = vmatprep.subr.bf16.mxu0 %v1406
  %1868 = vmatpush1.bf16.msra.mxu0 %v1405
  %1869 = vmatprep.mubr.bf16.mxu0 %v186
  %1870 = vmatmul.mubr.bf16.gmra.mrb[0].mxu0 %v185
  %v1871 = vpop.f32.mrb[0].mxu0
  %v1872 = vadd.f32 %v1831, %v1871
  %v1873 = vpop.f32.mrb[0].mxu0
  %v1874 = vadd.f32 %v1833, %v1873
  %v1875 = vpop.f32.mrb[0].mxu0
  %v1876 = vpop.f32.mrb[0].mxu0
  %1877 = vdwg.mxu0
  %1878 = vmatprep.subr.bf16.mxu0 0
  %1879 = vmatpush1.bf16.msra.mxu0 %v1190
  %1880 = vmatprep.subr.bf16.mxu0 0
  %1881 = vmatpush1.bf16.msra.mxu0 %v1197
  %1882 = vmatprep.subr.bf16.mxu0 0
  %1883 = vmatpush1.bf16.msra.mxu0 %v1204
  %1884 = vmatprep.subr.bf16.mxu0 0
  %1885 = vmatpush1.bf16.msra.mxu0 %v1211
  %1886 = vmatprep.subr.bf16.mxu0 0
  %1887 = vmatpush1.bf16.msra.mxu0 %v1218
  %1888 = vmatprep.subr.bf16.mxu0 0
  %1889 = vmatpush1.bf16.msra.mxu0 %v1225
  %1890 = vmatprep.subr.bf16.mxu0 0
  %1891 = vmatpush1.bf16.msra.mxu0 %v1232
  %1892 = vmatprep.subr.bf16.mxu0 0
  %1893 = vmatpush1.bf16.msra.mxu0 %v1239
  %1894 = vmatprep.subr.bf16.mxu0 0
  %1895 = vmatpush1.bf16.msra.mxu0 %v1246
  %1896 = vmatprep.subr.bf16.mxu0 0
  %1897 = vmatpush1.bf16.msra.mxu0 %v1253
  %1898 = vmatprep.subr.bf16.mxu0 0
  %1899 = vmatpush1.bf16.msra.mxu0 %v1260
  %1900 = vmatprep.subr.bf16.mxu0 0
  %1901 = vmatpush1.bf16.msra.mxu0 %v1267
  %1902 = vmatprep.subr.bf16.mxu0 0
  %1903 = vmatpush1.bf16.msra.mxu0 %v1274
  %1904 = vmatprep.subr.bf16.mxu0 0
  %1905 = vmatpush1.bf16.msra.mxu0 %v1281
  %1906 = vmatprep.subr.bf16.mxu0 0
  %1907 = vmatpush1.bf16.msra.mxu0 %v1288
  %1908 = vmatprep.subr.bf16.mxu0 0
  %1909 = vmatpush1.bf16.msra.mxu0 %v1295
  %1910 = vmatprep.mubr.bf16.mxu0 %v184
  %1911 = vmatmul.mubr.bf16.gmra.mrb[0].mxu0 %v183
  %v1912 = vpop.f32.mrb[0].mxu0
  %v1913 = vadd.f32 %v472, %v1912
  %v1914 = vpop.f32.mrb[0].mxu0
  %v1915 = vpop.f32.mrb[0].mxu0
  %v1916 = vpop.f32.mrb[0].mxu0
  %1917 = vdwg.mxu0
  %1918 = vmatprep.subr.bf16.mxu0 0
  %1919 = vmatpush1.bf16.msra.mxu0 %v1302
  %1920 = vmatprep.subr.bf16.mxu0 0
  %1921 = vmatpush1.bf16.msra.mxu0 %v1309
  %1922 = vmatprep.subr.bf16.mxu0 0
  %1923 = vmatpush1.bf16.msra.mxu0 %v1316
  %1924 = vmatprep.subr.bf16.mxu0 0
  %1925 = vmatpush1.bf16.msra.mxu0 %v1323
  %1926 = vmatprep.subr.bf16.mxu0 0
  %1927 = vmatpush1.bf16.msra.mxu0 %v1330
  %1928 = vmatprep.subr.bf16.mxu0 0
  %1929 = vmatpush1.bf16.msra.mxu0 %v1337
  %1930 = vmatprep.subr.bf16.mxu0 0
  %1931 = vmatpush1.bf16.msra.mxu0 %v1344
  %1932 = vmatprep.subr.bf16.mxu0 0
  %1933 = vmatpush1.bf16.msra.mxu0 %v1351
  %1934 = vmatprep.subr.bf16.mxu0 0
  %1935 = vmatpush1.bf16.msra.mxu0 %v1358
  %1936 = vmatprep.subr.bf16.mxu0 0
  %1937 = vmatpush1.bf16.msra.mxu0 %v1365
  %1938 = vmatprep.subr.bf16.mxu0 0
  %1939 = vmatpush1.bf16.msra.mxu0 %v1372
  %1940 = vmatprep.subr.bf16.mxu0 0
  %1941 = vmatpush1.bf16.msra.mxu0 %v1379
  %1942 = vmatprep.subr.bf16.mxu0 0
  %1943 = vmatpush1.bf16.msra.mxu0 %v1386
  %1944 = vmatprep.subr.bf16.mxu0 0
  %1945 = vmatpush1.bf16.msra.mxu0 %v1393
  %1946 = vmatprep.subr.bf16.mxu0 0
  %1947 = vmatpush1.bf16.msra.mxu0 %v1400
  %1948 = vmatprep.subr.bf16.mxu0 0
  %1949 = vmatpush1.bf16.msra.mxu0 %v1407
  %1950 = vmatprep.mubr.bf16.mxu0 %v186
  %1951 = vmatmul.mubr.bf16.gmra.mrb[0].mxu0 %v185
  %v1952 = vpop.f32.mrb[0].mxu0
  %v1953 = vadd.f32 %v1913, %v1952
  %v1954 = vpop.f32.mrb[0].mxu0
  %v1955 = vpop.f32.mrb[0].mxu0
  %v1956 = vpop.f32.mrb[0].mxu0
  %1957 = vdwg.mxu0
  %v1958 = vxor.u32 %v1708, 2147483648
  %v1959 = vxor.u32 %v1710, 2147483648
  %v1960 = vxor.u32 %v1790, 2147483648
  %v1961 = vxor.u32 %v1792, 2147483648
  %v1962 = vxor.u32 %v1872, 2147483648
  %v1963 = vxor.u32 %v1874, 2147483648
  %v1964 = vxor.u32 %v1953, 2147483648
  %v1965 = vmul.f32 %v1958, 1.442695
  %v1966 = vpow.pop %v1965
  %v1967 = vmul.f32 %v1959, 1.442695
  %v1968 = vpow.pop %v1967
  %v1969 = vmul.f32 %v1960, 1.442695
  %v1970 = vpow.pop %v1969
  %v1971 = vmul.f32 %v1961, 1.442695
  %v1972 = vpow.pop %v1971
  %v1973 = vmul.f32 %v1962, 1.442695
  %v1974 = vpow.pop %v1973
  %v1975 = vmul.f32 %v1963, 1.442695
  %v1976 = vpow.pop %v1975
  %v1977 = vmul.f32 %v1964, 1.442695
  %v1978 = vpow.pop %v1977
  %v1979 = vadd.f32 %v1966, 1.0
  %v1980 = vadd.f32 %v1968, 1.0
  %v1981 = vadd.f32 %v1970, 1.0
  %v1982 = vadd.f32 %v1972, 1.0
  %v1983 = vadd.f32 %v1974, 1.0
  %v1984 = vadd.f32 %v1976, 1.0
  %v1985 = vadd.f32 %v1978, 1.0
  %v1986 = vrcp.pop %v1979
  %v1987 = vmul.f32 1.0, %v1986
  %v1988 = vrcp.pop %v1980
  %v1989 = vmul.f32 1.0, %v1988
  %v1990 = vrcp.pop %v1981
  %v1991 = vmul.f32 1.0, %v1990
  %v1992 = vrcp.pop %v1982
  %v1993 = vmul.f32 1.0, %v1992
  %v1994 = vrcp.pop %v1983
  %v1995 = vmul.f32 1.0, %v1994
  %v1996 = vrcp.pop %v1984
  %v1997 = vmul.f32 1.0, %v1996
  %v1998 = vrcp.pop %v1985
  %v1999 = vmul.f32 1.0, %v1998
  %2000 = vst [vmem:[%s5] sm:$0xff] %v1987
  %2001 = vst [vmem:[%s5 + $0x8] sm:$0xff] %v1989
  %2002 = vst [vmem:[%s5 + $0x10] sm:$0xff] %v1991
  %2003 = vst [vmem:[%s5 + $0x18] sm:$0xff] %v1993
  %2004 = vst [vmem:[%s5 + $0x20] sm:$0xff] %v1995
  %2005 = vst [vmem:[%s5 + $0x28] sm:$0xff] %v1997
  %vm2006 = vcmask 130048
  %2007 = vst.msk [vmem:[%s5 + $0x30] sm:$0xff] %vm2006, %v1999
  // Predicated region
  $region22: #{decoder_forward.1} parent=0 // pred_check
    _
  $region23: #{decoder_forward.1} parent=0 // pred_check_branch
    %2009 = sbr.rel (0) target = $region25
  $region24: #{decoder_forward.1} parent=0 // pred_region
    _
  $region25: #{decoder_forward.1} parent=0 // pred_fallthru
    _
  // Predicated region
  $region26: #{decoder_forward.1} parent=0 // pred_check
    _
  $region27: #{decoder_forward.1} parent=0 // pred_check_branch
    %2011 = sbr.rel (0) target = $region29
  $region28: #{decoder_forward.1} parent=0 // pred_region
    _
  $region29: #{decoder_forward.1} parent=0 // pred_fallthru
    _

</llo_original>
